<compile_context>
chip_gen: v5e
topology: v5e:2x2
jax: 0.10.0
libtpu: 0.0.40
codegen_flags: <defaults>
</compile_context>

<pallas_src>
import numpy as np
import jax
import jax.numpy as jnp
from jax import lax
from jax.experimental import pallas as pl
from jax.experimental.pallas import tpu as pltpu


# ----------------------------------------------------------------------------
# Fused kernel (closure over the static batch-tile size / class count)
# ----------------------------------------------------------------------------
def _make_kernel(BT, K):
    """One fused LeNet-5 forward step for a tile of BT (multiple of 8) images."""

    def kernel(x_ref, w1t_ref, b1l_ref, w2t_ref, b2l_ref,
               fw1p_ref, fb1_ref, fw2_ref, fb2_ref, fw3_ref, fb3_ref, out_ref):
        # x_ref: (28, BT, 28) = [h, b, w]; merge (h, b) -> rows = h*BT + b.
        # BT % 8 == 0, so this is a tile-aligned (free) reshape.
        x2d = x_ref[...].reshape(28 * BT, 28)

        # ---- conv1 (1->6, 5x5): 5 accumulating Toeplitz matmuls over kh ----
        # y1 rows = i*BT + b (i in 0..23), lanes = j*6 + o (144 dense lanes).
        # Tap row slices start at kh*BT (8-aligned).
        y1 = jnp.dot(x2d[0:24 * BT, :], w1t_ref[0],
                     preferred_element_type=jnp.float32)
        for kh in range(1, 5):
            y1 = y1 + jnp.dot(x2d[kh * BT:(kh + 24) * BT, :], w1t_ref[kh],
                              preferred_element_type=jnp.float32)
        y1 = jnp.maximum(y1 + b1l_ref[...], 0.0)

        # ---- pool1 (2x2) ----
        # Column-pair max: two static lane slices (pair = 6 lanes apart).
        m1 = jnp.maximum(y1[:, 0:138], y1[:, 6:144])           # (24*BT, 138)
        # Row-pair max: aligned leading-dim reshape + two 8-aligned sublane slices.
        m1 = m1.reshape(12, 2 * BT, 138)
        p1 = jnp.maximum(m1[:, 0:BT, :], m1[:, BT:2 * BT, :]).reshape(12 * BT, 138)
        # p1 rows = h*BT + b (h in 0..11).  The *valid* pooled columns live at
        # even-j lanes (l = 2w*6 + c); odd-j lanes hold junk that is multiplied
        # by zero rows of w2t, so no lane selection is needed.

        # ---- conv2 (6->16, 5x5): 5 accumulating Toeplitz matmuls over kh ----
        # y2 rows = i*BT + b (i in 0..7), lanes = j*16 + o (exactly 128 lanes).
        y2 = jnp.dot(p1[0:8 * BT, :], w2t_ref[0],
                     preferred_element_type=jnp.float32)
        for kh in range(1, 5):
            y2 = y2 + jnp.dot(p1[kh * BT:(kh + 8) * BT, :], w2t_ref[kh],
                              preferred_element_type=jnp.float32)
        y2 = jnp.maximum(y2 + b2l_ref[...], 0.0)

        # ---- pool2 (2x2) ----
        m2 = jnp.maximum(y2[:, 0:112], y2[:, 16:128])          # (8*BT, 112)
        m2 = m2.reshape(4, 2 * BT, 112)
        p2 = jnp.maximum(m2[:, 0:BT, :], m2[:, BT:2 * BT, :])  # (4, BT, 112)

        # ---- fc1 (256->120): 4 accumulating matmuls.  The torch flatten order
        # and the pool2 column selection are folded into fw1p (odd-j rows = 0),
        # so there is no flatten data movement at all. ----
        a1 = jnp.dot(p2[0], fw1p_ref[0], preferred_element_type=jnp.float32)
        for p in range(1, 4):
            a1 = a1 + jnp.dot(p2[p], fw1p_ref[p],
                              preferred_element_type=jnp.float32)
        a1 = jnp.maximum(a1 + fb1_ref[...], 0.0)

        # ---- fc2 / fc3 ----
        a2 = jnp.maximum(jnp.dot(a1, fw2_ref[...],
                                 preferred_element_type=jnp.float32)
                         + fb2_ref[...], 0.0)
        logits = jnp.dot(a2, fw3_ref[...],
                         preferred_element_type=jnp.float32) + fb3_ref[...]

        # ---- softmax (exact reciprocal keeps the tight tolerance) ----
        m = jnp.max(logits, axis=1, keepdims=True)
        e = jnp.exp(logits - m)
        probs = e * pl.reciprocal(jnp.sum(e, axis=1, keepdims=True))

        # ---- single merged output slab: [logits | probs] ----
        out_ref[...] = jnp.concatenate([logits, probs], axis=1)

    return kernel


# ----------------------------------------------------------------------------
# Wrapper-side weight preparation (pure layout plumbing, all tiny)
# ----------------------------------------------------------------------------
def _prep_params(c1w, c1b, c2w, c2b, f1w, f1b, f2w, f2b, f3w, f3b, K):
    f32 = jnp.float32
    c1w = c1w.astype(f32)
    c2w = c2w.astype(f32)
    f1w = f1w.astype(f32)
    f2w = f2w.astype(f32)
    f3w = f3w.astype(f32)

    # conv1 Toeplitz over the image-column (lane) dim:
    #   w1t[kh, w_in, j*6+o] = c1w[o, 0, kh, w_in - j]   if 0 <= w_in - j < 5
    T1 = (np.arange(28)[None, :, None]
          == np.arange(24)[None, None, :] + np.arange(5)[:, None, None]
          ).astype(np.float32)                                        # (5, 28, 24)
    w1t = jnp.einsum('ohk,kwj->hwjo', c1w[:, 0], T1).reshape(5, 28, 144)

    # conv2 Toeplitz with the pool1 column selection folded in (odd-j rows = 0):
    #   w2t[kh, jl*6+c, jo*16+o] = c2w[o, c, kh, jl//2 - jo]
    #       if jl even and 0 <= jl//2 - jo < 5, else 0
    kwi = np.arange(5)[:, None, None]
    jli = np.arange(23)[None, :, None]
    joi = np.arange(8)[None, None, :]
    T2 = ((jli % 2 == 0) & (jli // 2 == joi + kwi)).astype(np.float32)  # (5, 23, 8)
    w2t = jnp.einsum('ochk,klj->hlcjo', c2w, T2).reshape(5, 138, 128)

    # fc1, split per pooled row p; torch flatten order (c, p, q) and the pool2
    # column selection folded in (odd-j rows = 0):
    ji = np.arange(7)[:, None]
    qi = np.arange(4)[None, :]
    T3 = ((ji % 2 == 0) & (ji // 2 == qi)).astype(np.float32)           # (7, 4)
    fw1p = jnp.einsum('nopq,jq->pjon',
                      f1w.reshape(120, 16, 4, 4), T3).reshape(4, 112, 120)

    # Biases broadcast onto the lane layouts used above.
    b1l = jnp.tile(c1b.astype(f32), 24).reshape(1, 144)   # lane j*6+o  -> c1b[o]
    b2l = jnp.tile(c2b.astype(f32), 8).reshape(1, 128)    # lane j*16+o -> c2b[o]
    fb1 = f1b.astype(f32).reshape(1, 120)
    fb2 = f2b.astype(f32).reshape(1, 84)
    fb3 = f3b.astype(f32).reshape(1, K)
    fw2 = jnp.transpose(f2w)                               # (120, 84)
    fw3 = jnp.transpose(f3w)                               # (84, K)

    return (w1t, b1l, w2t, b2l, fw1p, fb1, fw2, fb2, fw3, fb3)


# ----------------------------------------------------------------------------
# Public forward
# ----------------------------------------------------------------------------
def garment_forward(x, c1w, c1b, c2w, c2b, f1w, f1b, f2w, f2b, f3w, f3b):
    B = x.shape[0]
    K = f3w.shape[0]

    # Batch tile: multiple of 8 so every in-kernel row slice is sublane-aligned;
    # capped at 64 images/tile so the per-step working set also fits v7x VMEM.
    if B >= 64:
        BT = 64
    else:
        BT = ((B + 7) // 8) * 8
    Bp = ((B + BT - 1) // BT) * BT
    grid = (Bp // BT,)

    # Raw input, just transposed to (h, b, w) and zero-padded on batch.
    x32 = x.astype(jnp.float32)[:, 0]                  # (B, 28, 28)
    x3 = jnp.transpose(x32, (1, 0, 2))                 # (28, B, 28)
    x3 = jnp.pad(x3, ((0, 0), (0, Bp - B), (0, 0)))    # (28, Bp, 28)

    params = _prep_params(c1w, c1b, c2w, c2b, f1w, f1b, f2w, f2b, f3w, f3b, K)

    kernel = _make_kernel(BT, K)

    def _resident(a):
        # Full-array block, constant index map -> stays resident across steps.
        return pl.BlockSpec(a.shape, lambda g, n=a.ndim: (0,) * n)

    out = pl.pallas_call(
        kernel,
        out_shape=jax.ShapeDtypeStruct((Bp, 2 * K), jnp.float32),
        grid=grid,
        in_specs=[pl.BlockSpec((28, BT, 28), lambda g: (0, g, 0))]
                 + [_resident(a) for a in params],
        out_specs=pl.BlockSpec((BT, 2 * K), lambda g: (g, 0)),
        compiler_params=pltpu.CompilerParams(
            dimension_semantics=("parallel",)),
    )(x3, *params)

    logits = out[:B, :K]
    probs = out[:B, K:]
    return probs, logits


# ----------------------------------------------------------------------------
# Pure-JAX reference (correctness smoke check)
# ----------------------------------------------------------------------------
def garment_reference(x, c1w, c1b, c2w, c2b, f1w, f1b, f2w, f2b, f3w, f3b):
    x = x.astype(jnp.float32)
    dn = ("NCHW", "OIHW", "NCHW")
    y = lax.conv_general_dilated(x, c1w, (1, 1), "VALID", dimension_numbers=dn)
    y = jnp.maximum(y + c1b[None, :, None, None], 0.0)
    y = lax.reduce_window(y, -jnp.inf, lax.max, (1, 1, 2, 2), (1, 1, 2, 2), "VALID")
    y = lax.conv_general_dilated(y, c2w, (1, 1), "VALID", dimension_numbers=dn)
    y = jnp.maximum(y + c2b[None, :, None, None], 0.0)
    y = lax.reduce_window(y, -jnp.inf, lax.max, (1, 1, 2, 2), (1, 1, 2, 2), "VALID")
    feat = y.reshape(y.shape[0], -1)                    # torch x.view(-1, 256)
    a1 = jnp.maximum(feat @ f1w.T + f1b, 0.0)
    a2 = jnp.maximum(a1 @ f2w.T + f2b, 0.0)
    logits = a2 @ f3w.T + f3b
    return jax.nn.softmax(logits, axis=1), logits


if __name__ == "__main__":
    # Shapes implied by the module: 28x28 single-channel input, K=10 classes.
    B, K = 2, 10
    key = jax.random.PRNGKey(0)
    ks = jax.random.split(key, 11)
    x = jax.random.normal(ks[0], (B, 1, 28, 28), jnp.float32)
    c1w = jax.random.normal(ks[1], (6, 1, 5, 5), jnp.float32) * 0.2
    c1b = jax.random.normal(ks[2], (6,), jnp.float32) * 0.1
    c2w = jax.random.normal(ks[3], (16, 6, 5, 5), jnp.float32) * 0.05
    c2b = jax.random.normal(ks[4], (16,), jnp.float32) * 0.1
    f1w = jax.random.normal(ks[5], (120, 256), jnp.float32) * 0.03
    f1b = jax.random.normal(ks[6], (120,), jnp.float32) * 0.1
    f2w = jax.random.normal(ks[7], (84, 120), jnp.float32) * 0.05
    f2b = jax.random.normal(ks[8], (84,), jnp.float32) * 0.1
    f3w = jax.random.normal(ks[9], (K, 84), jnp.float32) * 0.05
    f3b = jax.random.normal(ks[10], (K,), jnp.float32) * 0.1

    probs, logits = jax.jit(garment_forward)(
        x, c1w, c1b, c2w, c2b, f1w, f1b, f2w, f2b, f3w, f3b)
    jax.block_until_ready((probs, logits))

    probs_ref, logits_ref = garment_reference(
        x, c1w, c1b, c2w, c2b, f1w, f1b, f2w, f2b, f3w, f3b)
    assert jnp.allclose(logits, logits_ref, atol=1e-4, rtol=1e-4), "logits mismatch"
    assert jnp.allclose(probs, probs_ref, atol=1e-5, rtol=1e-4), "softmax mismatch"

    print("KERNEL_OK")
</pallas_src>

<mosaic_0001>
module attributes {stable_mosaic.version = 11 : i64} {
  func.func @kernel(%arg0: i32, %arg1: memref<28x8x28xf32, #tpu.memory_space<vmem>>, %arg2: memref<5x28x144xf32, #tpu.memory_space<vmem>>, %arg3: memref<1x144xf32, #tpu.memory_space<vmem>>, %arg4: memref<5x138x128xf32, #tpu.memory_space<vmem>>, %arg5: memref<1x128xf32, #tpu.memory_space<vmem>>, %arg6: memref<4x112x120xf32, #tpu.memory_space<vmem>>, %arg7: memref<1x120xf32, #tpu.memory_space<vmem>>, %arg8: memref<120x84xf32, #tpu.memory_space<vmem>>, %arg9: memref<1x84xf32, #tpu.memory_space<vmem>>, %arg10: memref<84x10xf32, #tpu.memory_space<vmem>>, %arg11: memref<1x10xf32, #tpu.memory_space<vmem>>, %arg12: memref<8x20xf32, #tpu.memory_space<vmem>>) attributes {dimension_semantics = [#tpu.dimension_semantics<parallel>], iteration_bounds = array<i64: 1>, scalar_prefetch = 0 : i64, scratch_operands = 0 : i64, tpu.core_type = #tpu.core_type<tc>, window_params = [{transform_indices = @transform_0, window_bounds = array<i64: 28, 8, 28>}, {pipeline_mode = #tpu.pipeline_mode<synchronous>, transform_indices = @transform_1, window_bounds = array<i64: 5, 28, 144>}, {pipeline_mode = #tpu.pipeline_mode<synchronous>, transform_indices = @transform_2, window_bounds = array<i64: 1, 144>}, {pipeline_mode = #tpu.pipeline_mode<synchronous>, transform_indices = @transform_3, window_bounds = array<i64: 5, 138, 128>}, {pipeline_mode = #tpu.pipeline_mode<synchronous>, transform_indices = @transform_4, window_bounds = array<i64: 1, 128>}, {pipeline_mode = #tpu.pipeline_mode<synchronous>, transform_indices = @transform_5, window_bounds = array<i64: 4, 112, 120>}, {pipeline_mode = #tpu.pipeline_mode<synchronous>, transform_indices = @transform_6, window_bounds = array<i64: 1, 120>}, {pipeline_mode = #tpu.pipeline_mode<synchronous>, transform_indices = @transform_7, window_bounds = array<i64: 120, 84>}, {pipeline_mode = #tpu.pipeline_mode<synchronous>, transform_indices = @transform_8, window_bounds = array<i64: 1, 84>}, {pipeline_mode = #tpu.pipeline_mode<synchronous>, transform_indices = @transform_9, window_bounds = array<i64: 84, 10>}, {pipeline_mode = #tpu.pipeline_mode<synchronous>, transform_indices = @transform_10, window_bounds = array<i64: 1, 10>}, {transform_indices = @transform_11, window_bounds = array<i64: 8, 20>}]} {
    %c0 = arith.constant 0 : index
    %c0_0 = arith.constant 0 : index
    %c0_1 = arith.constant 0 : index
    %0 = vector.load %arg1[%c0, %c0_0, %c0_1] : memref<28x8x28xf32, #tpu.memory_space<vmem>>, vector<28x8x28xf32>
    %1 = vector.shape_cast %0 : vector<28x8x28xf32> to vector<224x28xf32>
    %2 = vector.extract_strided_slice %1 {offsets = [0, 0], sizes = [192, 28], strides = [1, 1]} : vector<224x28xf32> to vector<192x28xf32>
    %c0_2 = arith.constant 0 : index
    %c0_3 = arith.constant 0 : index
    %c0_4 = arith.constant 0 : index
    %3 = vector.load %arg2[%c0_2, %c0_3, %c0_4] : memref<5x28x144xf32, #tpu.memory_space<vmem>>, vector<1x28x144xf32>
    %4 = vector.shape_cast %3 : vector<1x28x144xf32> to vector<28x144xf32>
    %cst = arith.constant dense<0.000000e+00> : vector<192x144xf32>
    %5 = tpu.matmul %2, %4, %cst {dimension_numbers = #tpu.dot_dimension_numbers<[1], [0], [0], [1], [0, 0, 1, 1], [], []>} : vector<192x28xf32>, vector<28x144xf32>, vector<192x144xf32> -> vector<192x144xf32>
    %6 = vector.extract_strided_slice %1 {offsets = [8, 0], sizes = [192, 28], strides = [1, 1]} : vector<224x28xf32> to vector<192x28xf32>
    %c1 = arith.constant 1 : index
    %c0_5 = arith.constant 0 : index
    %c0_6 = arith.constant 0 : index
    %7 = vector.load %arg2[%c1, %c0_5, %c0_6] : memref<5x28x144xf32, #tpu.memory_space<vmem>>, vector<1x28x144xf32>
    %8 = vector.shape_cast %7 : vector<1x28x144xf32> to vector<28x144xf32>
    %cst_7 = arith.constant dense<0.000000e+00> : vector<192x144xf32>
    %9 = tpu.matmul %6, %8, %cst_7 {dimension_numbers = #tpu.dot_dimension_numbers<[1], [0], [0], [1], [0, 0, 1, 1], [], []>} : vector<192x28xf32>, vector<28x144xf32>, vector<192x144xf32> -> vector<192x144xf32>
    %10 = arith.addf %5, %9 : vector<192x144xf32>
    %11 = vector.extract_strided_slice %1 {offsets = [16, 0], sizes = [192, 28], strides = [1, 1]} : vector<224x28xf32> to vector<192x28xf32>
    %c2 = arith.constant 2 : index
    %c0_8 = arith.constant 0 : index
    %c0_9 = arith.constant 0 : index
    %12 = vector.load %arg2[%c2, %c0_8, %c0_9] : memref<5x28x144xf32, #tpu.memory_space<vmem>>, vector<1x28x144xf32>
    %13 = vector.shape_cast %12 : vector<1x28x144xf32> to vector<28x144xf32>
    %cst_10 = arith.constant dense<0.000000e+00> : vector<192x144xf32>
    %14 = tpu.matmul %11, %13, %cst_10 {dimension_numbers = #tpu.dot_dimension_numbers<[1], [0], [0], [1], [0, 0, 1, 1], [], []>} : vector<192x28xf32>, vector<28x144xf32>, vector<192x144xf32> -> vector<192x144xf32>
    %15 = arith.addf %10, %14 : vector<192x144xf32>
    %16 = vector.extract_strided_slice %1 {offsets = [24, 0], sizes = [192, 28], strides = [1, 1]} : vector<224x28xf32> to vector<192x28xf32>
    %c3 = arith.constant 3 : index
    %c0_11 = arith.constant 0 : index
    %c0_12 = arith.constant 0 : index
    %17 = vector.load %arg2[%c3, %c0_11, %c0_12] : memref<5x28x144xf32, #tpu.memory_space<vmem>>, vector<1x28x144xf32>
    %18 = vector.shape_cast %17 : vector<1x28x144xf32> to vector<28x144xf32>
    %cst_13 = arith.constant dense<0.000000e+00> : vector<192x144xf32>
    %19 = tpu.matmul %16, %18, %cst_13 {dimension_numbers = #tpu.dot_dimension_numbers<[1], [0], [0], [1], [0, 0, 1, 1], [], []>} : vector<192x28xf32>, vector<28x144xf32>, vector<192x144xf32> -> vector<192x144xf32>
    %20 = arith.addf %15, %19 : vector<192x144xf32>
    %21 = vector.extract_strided_slice %1 {offsets = [32, 0], sizes = [192, 28], strides = [1, 1]} : vector<224x28xf32> to vector<192x28xf32>
    %c4 = arith.constant 4 : index
    %c0_14 = arith.constant 0 : index
    %c0_15 = arith.constant 0 : index
    %22 = vector.load %arg2[%c4, %c0_14, %c0_15] : memref<5x28x144xf32, #tpu.memory_space<vmem>>, vector<1x28x144xf32>
    %23 = vector.shape_cast %22 : vector<1x28x144xf32> to vector<28x144xf32>
    %cst_16 = arith.constant dense<0.000000e+00> : vector<192x144xf32>
    %24 = tpu.matmul %21, %23, %cst_16 {dimension_numbers = #tpu.dot_dimension_numbers<[1], [0], [0], [1], [0, 0, 1, 1], [], []>} : vector<192x28xf32>, vector<28x144xf32>, vector<192x144xf32> -> vector<192x144xf32>
    %25 = arith.addf %20, %24 : vector<192x144xf32>
    %c0_17 = arith.constant 0 : index
    %c0_18 = arith.constant 0 : index
    %26 = vector.load %arg3[%c0_17, %c0_18] : memref<1x144xf32, #tpu.memory_space<vmem>>, vector<1x144xf32>
    %27 = vector.broadcast %26 : vector<1x144xf32> to vector<192x144xf32>
    %28 = arith.addf %25, %27 : vector<192x144xf32>
    %cst_19 = arith.constant 0.000000e+00 : f32
    %29 = vector.broadcast %cst_19 : f32 to vector<192x144xf32>
    %30 = arith.maximumf %28, %29 : vector<192x144xf32>
    %31 = vector.extract_strided_slice %30 {offsets = [0, 0], sizes = [192, 138], strides = [1, 1]} : vector<192x144xf32> to vector<192x138xf32>
    %32 = vector.extract_strided_slice %30 {offsets = [0, 6], sizes = [192, 138], strides = [1, 1]} : vector<192x144xf32> to vector<192x138xf32>
    %33 = arith.maximumf %31, %32 : vector<192x138xf32>
    %34 = vector.shape_cast %33 : vector<192x138xf32> to vector<12x16x138xf32>
    %35 = vector.extract_strided_slice %34 {offsets = [0, 0, 0], sizes = [12, 8, 138], strides = [1, 1, 1]} : vector<12x16x138xf32> to vector<12x8x138xf32>
    %36 = vector.extract_strided_slice %34 {offsets = [0, 8, 0], sizes = [12, 8, 138], strides = [1, 1, 1]} : vector<12x16x138xf32> to vector<12x8x138xf32>
    %37 = arith.maximumf %35, %36 : vector<12x8x138xf32>
    %38 = vector.shape_cast %37 : vector<12x8x138xf32> to vector<96x138xf32>
    %39 = vector.extract_strided_slice %38 {offsets = [0, 0], sizes = [64, 138], strides = [1, 1]} : vector<96x138xf32> to vector<64x138xf32>
    %c0_20 = arith.constant 0 : index
    %c0_21 = arith.constant 0 : index
    %c0_22 = arith.constant 0 : index
    %40 = vector.load %arg4[%c0_20, %c0_21, %c0_22] : memref<5x138x128xf32, #tpu.memory_space<vmem>>, vector<1x138x128xf32>
    %41 = vector.shape_cast %40 : vector<1x138x128xf32> to vector<138x128xf32>
    %cst_23 = arith.constant dense<0.000000e+00> : vector<64x128xf32>
    %42 = tpu.matmul %39, %41, %cst_23 {dimension_numbers = #tpu.dot_dimension_numbers<[1], [0], [0], [1], [0, 0, 1, 1], [], []>} : vector<64x138xf32>, vector<138x128xf32>, vector<64x128xf32> -> vector<64x128xf32>
    %43 = vector.extract_strided_slice %38 {offsets = [8, 0], sizes = [64, 138], strides = [1, 1]} : vector<96x138xf32> to vector<64x138xf32>
    %c1_24 = arith.constant 1 : index
    %c0_25 = arith.constant 0 : index
    %c0_26 = arith.constant 0 : index
    %44 = vector.load %arg4[%c1_24, %c0_25, %c0_26] : memref<5x138x128xf32, #tpu.memory_space<vmem>>, vector<1x138x128xf32>
    %45 = vector.shape_cast %44 : vector<1x138x128xf32> to vector<138x128xf32>
    %cst_27 = arith.constant dense<0.000000e+00> : vector<64x128xf32>
    %46 = tpu.matmul %43, %45, %cst_27 {dimension_numbers = #tpu.dot_dimension_numbers<[1], [0], [0], [1], [0, 0, 1, 1], [], []>} : vector<64x138xf32>, vector<138x128xf32>, vector<64x128xf32> -> vector<64x128xf32>
    %47 = arith.addf %42, %46 : vector<64x128xf32>
    %48 = vector.extract_strided_slice %38 {offsets = [16, 0], sizes = [64, 138], strides = [1, 1]} : vector<96x138xf32> to vector<64x138xf32>
    %c2_28 = arith.constant 2 : index
    %c0_29 = arith.constant 0 : index
    %c0_30 = arith.constant 0 : index
    %49 = vector.load %arg4[%c2_28, %c0_29, %c0_30] : memref<5x138x128xf32, #tpu.memory_space<vmem>>, vector<1x138x128xf32>
    %50 = vector.shape_cast %49 : vector<1x138x128xf32> to vector<138x128xf32>
    %cst_31 = arith.constant dense<0.000000e+00> : vector<64x128xf32>
    %51 = tpu.matmul %48, %50, %cst_31 {dimension_numbers = #tpu.dot_dimension_numbers<[1], [0], [0], [1], [0, 0, 1, 1], [], []>} : vector<64x138xf32>, vector<138x128xf32>, vector<64x128xf32> -> vector<64x128xf32>
    %52 = arith.addf %47, %51 : vector<64x128xf32>
    %53 = vector.extract_strided_slice %38 {offsets = [24, 0], sizes = [64, 138], strides = [1, 1]} : vector<96x138xf32> to vector<64x138xf32>
    %c3_32 = arith.constant 3 : index
    %c0_33 = arith.constant 0 : index
    %c0_34 = arith.constant 0 : index
    %54 = vector.load %arg4[%c3_32, %c0_33, %c0_34] : memref<5x138x128xf32, #tpu.memory_space<vmem>>, vector<1x138x128xf32>
    %55 = vector.shape_cast %54 : vector<1x138x128xf32> to vector<138x128xf32>
    %cst_35 = arith.constant dense<0.000000e+00> : vector<64x128xf32>
    %56 = tpu.matmul %53, %55, %cst_35 {dimension_numbers = #tpu.dot_dimension_numbers<[1], [0], [0], [1], [0, 0, 1, 1], [], []>} : vector<64x138xf32>, vector<138x128xf32>, vector<64x128xf32> -> vector<64x128xf32>
    %57 = arith.addf %52, %56 : vector<64x128xf32>
    %58 = vector.extract_strided_slice %38 {offsets = [32, 0], sizes = [64, 138], strides = [1, 1]} : vector<96x138xf32> to vector<64x138xf32>
    %c4_36 = arith.constant 4 : index
    %c0_37 = arith.constant 0 : index
    %c0_38 = arith.constant 0 : index
    %59 = vector.load %arg4[%c4_36, %c0_37, %c0_38] : memref<5x138x128xf32, #tpu.memory_space<vmem>>, vector<1x138x128xf32>
    %60 = vector.shape_cast %59 : vector<1x138x128xf32> to vector<138x128xf32>
    %cst_39 = arith.constant dense<0.000000e+00> : vector<64x128xf32>
    %61 = tpu.matmul %58, %60, %cst_39 {dimension_numbers = #tpu.dot_dimension_numbers<[1], [0], [0], [1], [0, 0, 1, 1], [], []>} : vector<64x138xf32>, vector<138x128xf32>, vector<64x128xf32> -> vector<64x128xf32>
    %62 = arith.addf %57, %61 : vector<64x128xf32>
    %c0_40 = arith.constant 0 : index
    %c0_41 = arith.constant 0 : index
    %63 = vector.load %arg5[%c0_40, %c0_41] : memref<1x128xf32, #tpu.memory_space<vmem>>, vector<1x128xf32>
    %64 = vector.broadcast %63 : vector<1x128xf32> to vector<64x128xf32>
    %65 = arith.addf %62, %64 : vector<64x128xf32>
    %cst_42 = arith.constant 0.000000e+00 : f32
    %66 = vector.broadcast %cst_42 : f32 to vector<64x128xf32>
    %67 = arith.maximumf %65, %66 : vector<64x128xf32>
    %68 = vector.extract_strided_slice %67 {offsets = [0, 0], sizes = [64, 112], strides = [1, 1]} : vector<64x128xf32> to vector<64x112xf32>
    %69 = vector.extract_strided_slice %67 {offsets = [0, 16], sizes = [64, 112], strides = [1, 1]} : vector<64x128xf32> to vector<64x112xf32>
    %70 = arith.maximumf %68, %69 : vector<64x112xf32>
    %71 = vector.shape_cast %70 : vector<64x112xf32> to vector<4x16x112xf32>
    %72 = vector.extract_strided_slice %71 {offsets = [0, 0, 0], sizes = [4, 8, 112], strides = [1, 1, 1]} : vector<4x16x112xf32> to vector<4x8x112xf32>
    %73 = vector.extract_strided_slice %71 {offsets = [0, 8, 0], sizes = [4, 8, 112], strides = [1, 1, 1]} : vector<4x16x112xf32> to vector<4x8x112xf32>
    %74 = arith.maximumf %72, %73 : vector<4x8x112xf32>
    %75 = vector.extract_strided_slice %74 {offsets = [0, 0, 0], sizes = [1, 8, 112], strides = [1, 1, 1]} : vector<4x8x112xf32> to vector<1x8x112xf32>
    %76 = vector.shape_cast %75 : vector<1x8x112xf32> to vector<8x112xf32>
    %c0_43 = arith.constant 0 : index
    %c0_44 = arith.constant 0 : index
    %c0_45 = arith.constant 0 : index
    %77 = vector.load %arg6[%c0_43, %c0_44, %c0_45] : memref<4x112x120xf32, #tpu.memory_space<vmem>>, vector<1x112x120xf32>
    %78 = vector.shape_cast %77 : vector<1x112x120xf32> to vector<112x120xf32>
    %cst_46 = arith.constant dense<0.000000e+00> : vector<8x120xf32>
    %79 = tpu.matmul %76, %78, %cst_46 {dimension_numbers = #tpu.dot_dimension_numbers<[1], [0], [0], [1], [0, 0, 1, 1], [], []>} : vector<8x112xf32>, vector<112x120xf32>, vector<8x120xf32> -> vector<8x120xf32>
    %80 = vector.extract_strided_slice %74 {offsets = [1, 0, 0], sizes = [1, 8, 112], strides = [1, 1, 1]} : vector<4x8x112xf32> to vector<1x8x112xf32>
    %81 = vector.shape_cast %80 : vector<1x8x112xf32> to vector<8x112xf32>
    %c1_47 = arith.constant 1 : index
    %c0_48 = arith.constant 0 : index
    %c0_49 = arith.constant 0 : index
    %82 = vector.load %arg6[%c1_47, %c0_48, %c0_49] : memref<4x112x120xf32, #tpu.memory_space<vmem>>, vector<1x112x120xf32>
    %83 = vector.shape_cast %82 : vector<1x112x120xf32> to vector<112x120xf32>
    %cst_50 = arith.constant dense<0.000000e+00> : vector<8x120xf32>
    %84 = tpu.matmul %81, %83, %cst_50 {dimension_numbers = #tpu.dot_dimension_numbers<[1], [0], [0], [1], [0, 0, 1, 1], [], []>} : vector<8x112xf32>, vector<112x120xf32>, vector<8x120xf32> -> vector<8x120xf32>
    %85 = arith.addf %79, %84 : vector<8x120xf32>
    %86 = vector.extract_strided_slice %74 {offsets = [2, 0, 0], sizes = [1, 8, 112], strides = [1, 1, 1]} : vector<4x8x112xf32> to vector<1x8x112xf32>
    %87 = vector.shape_cast %86 : vector<1x8x112xf32> to vector<8x112xf32>
    %c2_51 = arith.constant 2 : index
    %c0_52 = arith.constant 0 : index
    %c0_53 = arith.constant 0 : index
    %88 = vector.load %arg6[%c2_51, %c0_52, %c0_53] : memref<4x112x120xf32, #tpu.memory_space<vmem>>, vector<1x112x120xf32>
    %89 = vector.shape_cast %88 : vector<1x112x120xf32> to vector<112x120xf32>
    %cst_54 = arith.constant dense<0.000000e+00> : vector<8x120xf32>
    %90 = tpu.matmul %87, %89, %cst_54 {dimension_numbers = #tpu.dot_dimension_numbers<[1], [0], [0], [1], [0, 0, 1, 1], [], []>} : vector<8x112xf32>, vector<112x120xf32>, vector<8x120xf32> -> vector<8x120xf32>
    %91 = arith.addf %85, %90 : vector<8x120xf32>
    %92 = vector.extract_strided_slice %74 {offsets = [3, 0, 0], sizes = [1, 8, 112], strides = [1, 1, 1]} : vector<4x8x112xf32> to vector<1x8x112xf32>
    %93 = vector.shape_cast %92 : vector<1x8x112xf32> to vector<8x112xf32>
    %c3_55 = arith.constant 3 : index
    %c0_56 = arith.constant 0 : index
    %c0_57 = arith.constant 0 : index
    %94 = vector.load %arg6[%c3_55, %c0_56, %c0_57] : memref<4x112x120xf32, #tpu.memory_space<vmem>>, vector<1x112x120xf32>
    %95 = vector.shape_cast %94 : vector<1x112x120xf32> to vector<112x120xf32>
    %cst_58 = arith.constant dense<0.000000e+00> : vector<8x120xf32>
    %96 = tpu.matmul %93, %95, %cst_58 {dimension_numbers = #tpu.dot_dimension_numbers<[1], [0], [0], [1], [0, 0, 1, 1], [], []>} : vector<8x112xf32>, vector<112x120xf32>, vector<8x120xf32> -> vector<8x120xf32>
    %97 = arith.addf %91, %96 : vector<8x120xf32>
    %c0_59 = arith.constant 0 : index
    %c0_60 = arith.constant 0 : index
    %98 = vector.load %arg7[%c0_59, %c0_60] : memref<1x120xf32, #tpu.memory_space<vmem>>, vector<1x120xf32>
    %99 = vector.broadcast %98 : vector<1x120xf32> to vector<8x120xf32>
    %100 = arith.addf %97, %99 : vector<8x120xf32>
    %cst_61 = arith.constant 0.000000e+00 : f32
    %101 = vector.broadcast %cst_61 : f32 to vector<8x120xf32>
    %102 = arith.maximumf %100, %101 : vector<8x120xf32>
    %c0_62 = arith.constant 0 : index
    %c0_63 = arith.constant 0 : index
    %103 = vector.load %arg8[%c0_62, %c0_63] : memref<120x84xf32, #tpu.memory_space<vmem>>, vector<120x84xf32>
    %cst_64 = arith.constant dense<0.000000e+00> : vector<8x84xf32>
    %104 = tpu.matmul %102, %103, %cst_64 {dimension_numbers = #tpu.dot_dimension_numbers<[1], [0], [0], [1], [0, 0, 1, 1], [], []>} : vector<8x120xf32>, vector<120x84xf32>, vector<8x84xf32> -> vector<8x84xf32>
    %c0_65 = arith.constant 0 : index
    %c0_66 = arith.constant 0 : index
    %105 = vector.load %arg9[%c0_65, %c0_66] : memref<1x84xf32, #tpu.memory_space<vmem>>, vector<1x84xf32>
    %106 = vector.broadcast %105 : vector<1x84xf32> to vector<8x84xf32>
    %107 = arith.addf %104, %106 : vector<8x84xf32>
    %cst_67 = arith.constant 0.000000e+00 : f32
    %108 = vector.broadcast %cst_67 : f32 to vector<8x84xf32>
    %109 = arith.maximumf %107, %108 : vector<8x84xf32>
    %c0_68 = arith.constant 0 : index
    %c0_69 = arith.constant 0 : index
    %110 = vector.load %arg10[%c0_68, %c0_69] : memref<84x10xf32, #tpu.memory_space<vmem>>, vector<84x10xf32>
    %cst_70 = arith.constant dense<0.000000e+00> : vector<8x10xf32>
    %111 = tpu.matmul %109, %110, %cst_70 {dimension_numbers = #tpu.dot_dimension_numbers<[1], [0], [0], [1], [0, 0, 1, 1], [], []>} : vector<8x84xf32>, vector<84x10xf32>, vector<8x10xf32> -> vector<8x10xf32>
    %c0_71 = arith.constant 0 : index
    %c0_72 = arith.constant 0 : index
    %112 = vector.load %arg11[%c0_71, %c0_72] : memref<1x10xf32, #tpu.memory_space<vmem>>, vector<1x10xf32>
    %113 = vector.broadcast %112 : vector<1x10xf32> to vector<8x10xf32>
    %114 = arith.addf %111, %113 : vector<8x10xf32>
    %cst_73 = arith.constant dense<0xFF800000> : vector<8xf32>
    %115 = vector.multi_reduction <maximumf>, %114, %cst_73 [1] : vector<8x10xf32> to vector<8xf32>
    %116 = vector.shape_cast %115 : vector<8xf32> to vector<8x1xf32>
    %117 = vector.broadcast %116 : vector<8x1xf32> to vector<8x10xf32>
    %118 = arith.subf %114, %117 : vector<8x10xf32>
    %119 = math.exp %118 : vector<8x10xf32>
    %cst_74 = arith.constant dense<0.000000e+00> : vector<8xf32>
    %120 = vector.multi_reduction <add>, %119, %cst_74 [1] : vector<8x10xf32> to vector<8xf32>
    %121 = vector.shape_cast %120 : vector<8xf32> to vector<8x1xf32>
    %122 = tpu.reciprocal %121 : vector<8x1xf32> -> vector<8x1xf32>
    %123 = vector.broadcast %122 : vector<8x1xf32> to vector<8x10xf32>
    %124 = arith.mulf %119, %123 : vector<8x10xf32>
    %125 = tpu.concatenate %114, %124 in 1 : vector<8x10xf32>, vector<8x10xf32> -> vector<8x20xf32>
    %c0_75 = arith.constant 0 : index
    %c0_76 = arith.constant 0 : index
    %126 = vector.load %arg12[%c0_75, %c0_76] : memref<8x20xf32, #tpu.memory_space<vmem>>, vector<8x20xf32>
    tpu.vector_store %arg12[%c0_75, %c0_76], %125 {strides = array<i32>} : memref<8x20xf32, #tpu.memory_space<vmem>>, vector<8x20xf32>,
    return
  }
  func.func @transform_0(%arg0: i32) -> (i32, i32, i32) {
    %c0_i32 = arith.constant 0 : i32
    %c0_i32_0 = arith.constant 0 : i32
    %c0_i32_1 = arith.constant 0 : i32
    return %c0_i32, %arg0, %c0_i32_0 : i32, i32, i32
  }
  func.func @transform_1(%arg0: i32) -> (i32, i32, i32) {
    %c0_i32 = arith.constant 0 : i32
    %c0_i32_0 = arith.constant 0 : i32
    %c0_i32_1 = arith.constant 0 : i32
    %c0_i32_2 = arith.constant 0 : i32
    return %c0_i32, %c0_i32_0, %c0_i32_1 : i32, i32, i32
  }
  func.func @transform_2(%arg0: i32) -> (i32, i32) {
    %c0_i32 = arith.constant 0 : i32
    %c0_i32_0 = arith.constant 0 : i32
    %c0_i32_1 = arith.constant 0 : i32
    return %c0_i32, %c0_i32_0 : i32, i32
  }
  func.func @transform_3(%arg0: i32) -> (i32, i32, i32) {
    %c0_i32 = arith.constant 0 : i32
    %c0_i32_0 = arith.constant 0 : i32
    %c0_i32_1 = arith.constant 0 : i32
    %c0_i32_2 = arith.constant 0 : i32
    return %c0_i32, %c0_i32_0, %c0_i32_1 : i32, i32, i32
  }
  func.func @transform_4(%arg0: i32) -> (i32, i32) {
    %c0_i32 = arith.constant 0 : i32
    %c0_i32_0 = arith.constant 0 : i32
    %c0_i32_1 = arith.constant 0 : i32
    return %c0_i32, %c0_i32_0 : i32, i32
  }
  func.func @transform_5(%arg0: i32) -> (i32, i32, i32) {
    %c0_i32 = arith.constant 0 : i32
    %c0_i32_0 = arith.constant 0 : i32
    %c0_i32_1 = arith.constant 0 : i32
    %c0_i32_2 = arith.constant 0 : i32
    return %c0_i32, %c0_i32_0, %c0_i32_1 : i32, i32, i32
  }
  func.func @transform_6(%arg0: i32) -> (i32, i32) {
    %c0_i32 = arith.constant 0 : i32
    %c0_i32_0 = arith.constant 0 : i32
    %c0_i32_1 = arith.constant 0 : i32
    return %c0_i32, %c0_i32_0 : i32, i32
  }
  func.func @transform_7(%arg0: i32) -> (i32, i32) {
    %c0_i32 = arith.constant 0 : i32
    %c0_i32_0 = arith.constant 0 : i32
    %c0_i32_1 = arith.constant 0 : i32
    return %c0_i32, %c0_i32_0 : i32, i32
  }
  func.func @transform_8(%arg0: i32) -> (i32, i32) {
    %c0_i32 = arith.constant 0 : i32
    %c0_i32_0 = arith.constant 0 : i32
    %c0_i32_1 = arith.constant 0 : i32
    return %c0_i32, %c0_i32_0 : i32, i32
  }
  func.func @transform_9(%arg0: i32) -> (i32, i32) {
    %c0_i32 = arith.constant 0 : i32
    %c0_i32_0 = arith.constant 0 : i32
    %c0_i32_1 = arith.constant 0 : i32
    return %c0_i32, %c0_i32_0 : i32, i32
  }
  func.func @transform_10(%arg0: i32) -> (i32, i32) {
    %c0_i32 = arith.constant 0 : i32
    %c0_i32_0 = arith.constant 0 : i32
    %c0_i32_1 = arith.constant 0 : i32
    return %c0_i32, %c0_i32_0 : i32, i32
  }
  func.func @transform_11(%arg0: i32) -> (i32, i32) {
    %c0_i32 = arith.constant 0 : i32
    %c0_i32_0 = arith.constant 0 : i32
    return %arg0, %c0_i32 : i32, i32
  }
}

</mosaic_0001>

<llo_original>
// kernel: tile.13
$region0: #{tile.13}
  #allocation0 [shape = 's32[1]{0}', space=sflag, size = 0x4, scoped, tag = 'scoped memory for tile.13']
  %s0 = inlined_call_operand.vmem [shape: f32[6], index: 0, kind: input, shape index: {}]
  %s1 = inlined_call_operand.vmem [shape: f32[24,6], index: 1, kind: output, shape index: {}]
  // Predicated region
  $region2: #{tile.13} parent=0 // pred_check
    _
  $region3: #{tile.13} parent=0 // pred_check_branch
    %3 = sbr.rel (0) target = $region5
  $region4: #{tile.13} parent=0 // pred_region
    _
  $region5: #{tile.13} parent=0 // pred_fallthru
    _
  %v4 = vld [vmem:[%s0] ss:$0 sm:$0xff]
  %5 = vst [vmem:[%s1] sm:$0xff] %v4
  %s6 = scalar_lea.vmem %s1, 8
  %7 = vst [vmem:[%s6] sm:$0xff] %v4
  %s8 = scalar_lea.vmem %s1, 16
  %9 = vst [vmem:[%s8] sm:$0xff] %v4

// kernel: tile.18
$region0: #{tile.18}
  #allocation0 [shape = 's32[1]{0}', space=sflag, size = 0x4, scoped, tag = 'scoped memory for tile.18']
  %s0 = inlined_call_operand.vmem [shape: f32[16], index: 0, kind: input, shape index: {}]
  %s1 = inlined_call_operand.vmem [shape: f32[8,16], index: 1, kind: output, shape index: {}]
  // Predicated region
  $region2: #{tile.18} parent=0 // pred_check
    _
  $region3: #{tile.18} parent=0 // pred_check_branch
    %3 = sbr.rel (0) target = $region5
  $region4: #{tile.18} parent=0 // pred_region
    _
  $region5: #{tile.18} parent=0 // pred_fallthru
    _
  %v4 = vld [vmem:[%s0] ss:$0 sm:$0xff]
  %5 = vst [vmem:[%s1] sm:$0xff] %v4

// kernel: tile.14
$region0: #{tile.14}
  %s0 = inlined_call_operand.vmem [shape: f32[24,6], index: 0, kind: input, shape index: {}]
  %s1 = inlined_call_operand.vmem [shape: f32[1,144], index: 1, kind: output, shape index: {}]
  $region1: #{tile.14} parent=0
    #allocation0 [shape = 'u8[8192]{0}', space=vmem, size = 0x2000, scoped, tag = 'scoped mem for output reshape']
    %v2 = vld [vmem:[%s0] sm:$0x1]
    %vm3 = vcmask 48128
    %4 = vst.msk [vmem:[#allocation0] sm:$0x1] %vm3, %v2
    %s5 = scalar_lea.vmem %s0, 21
    %v6 = vld [vmem:[%s5] sm:$0x1]
    %s7 = scalar_lea.vmem %s0, 21
    %v8 = vld [vmem:[%s7] sm:$0x1]
    %vm9 = vcmask 15360
    %v10 = vsel %vm9, %v8, %v6
    %11 = vrot.lane.b32.xlu0 %v10, 126
    %v12 = vpop.permute.xlu0 %11
    %vm13 = vcmask 31744
    %s14 = scalar_lea.vmem [#allocation0], 8
    %15 = vst.msk [vmem:[%s14] sm:$0x1] %vm13, %v12
    %vm16 = vcmask 1048560
    %17 = vst.msk [vmem:[#allocation0] sm:$0x1] %vm16, %v12
    %s18 = scalar_lea.vmem %s0, 20
    %v19 = vld [vmem:[%s18] sm:$0x1]
    %20 = vrot.lane.b32.xlu0 %v19, 120
    %v21 = vpop.permute.xlu0 %20
    %vm22 = vcmask 1032128
    %23 = vst.msk [vmem:[#allocation0] sm:$0x1] %vm22, %v21
    %s24 = scalar_lea.vmem %s0, 19
    %v25 = vld [vmem:[%s24] sm:$0x1]
    %26 = vrot.lane.b32.xlu0 %v25, 114
    %v27 = vpop.permute.xlu0 %26
    %vm28 = vcmask 982928
    %29 = vst.msk [vmem:[#allocation0] sm:$0x1] %vm28, %v27
    %s30 = scalar_lea.vmem %s0, 18
    %v31 = vld [vmem:[%s30] sm:$0x1]
    %32 = vrot.lane.b32.xlu0 %v31, 108
    %v33 = vpop.permute.xlu0 %32
    %vm34 = vcmask 933728
    %35 = vst.msk [vmem:[#allocation0] sm:$0x1] %vm34, %v33
    %s36 = scalar_lea.vmem %s0, 17
    %v37 = vld [vmem:[%s36] sm:$0x1]
    %38 = vrot.lane.b32.xlu0 %v37, 102
    %v39 = vpop.permute.xlu0 %38
    %vm40 = vcmask 884528
    %41 = vst.msk [vmem:[#allocation0] sm:$0x1] %vm40, %v39
    %s42 = scalar_lea.vmem %s0, 16
    %v43 = vld [vmem:[%s42] sm:$0x1]
    %44 = vrot.lane.b32.xlu0 %v43, 96
    %v45 = vpop.permute.xlu0 %44
    %vm46 = vcmask 835328
    %47 = vst.msk [vmem:[#allocation0] sm:$0x1] %vm46, %v45
    %s48 = scalar_lea.vmem %s0, 15
    %v49 = vld [vmem:[%s48] sm:$0x1]
    %50 = vrot.lane.b32.xlu0 %v49, 90
    %v51 = vpop.permute.xlu0 %50
    %vm52 = vcmask 786128
    %53 = vst.msk [vmem:[#allocation0] sm:$0x1] %vm52, %v51
    %s54 = scalar_lea.vmem %s0, 14
    %v55 = vld [vmem:[%s54] sm:$0x1]
    %56 = vrot.lane.b32.xlu0 %v55, 84
    %v57 = vpop.permute.xlu0 %56
    %vm58 = vcmask 736928
    %59 = vst.msk [vmem:[#allocation0] sm:$0x1] %vm58, %v57
    %s60 = scalar_lea.vmem %s0, 13
    %v61 = vld [vmem:[%s60] sm:$0x1]
    %62 = vrot.lane.b32.xlu0 %v61, 78
    %v63 = vpop.permute.xlu0 %62
    %vm64 = vcmask 687728
    %65 = vst.msk [vmem:[#allocation0] sm:$0x1] %vm64, %v63
    %s66 = scalar_lea.vmem %s0, 12
    %v67 = vld [vmem:[%s66] sm:$0x1]
    %68 = vrot.lane.b32.xlu0 %v67, 72
    %v69 = vpop.permute.xlu0 %68
    %vm70 = vcmask 638528
    %71 = vst.msk [vmem:[#allocation0] sm:$0x1] %vm70, %v69
    %s72 = scalar_lea.vmem %s0, 11
    %v73 = vld [vmem:[%s72] sm:$0x1]
    %74 = vrot.lane.b32.xlu0 %v73, 66
    %v75 = vpop.permute.xlu0 %74
    %vm76 = vcmask 589328
    %77 = vst.msk [vmem:[#allocation0] sm:$0x1] %vm76, %v75
    %s78 = scalar_lea.vmem %s0, 10
    %v79 = vld [vmem:[%s78] sm:$0x1]
    %80 = vrot.lane.b32.xlu0 %v79, 60
    %v81 = vpop.permute.xlu0 %80
    %vm82 = vcmask 540128
    %83 = vst.msk [vmem:[#allocation0] sm:$0x1] %vm82, %v81
    %s84 = scalar_lea.vmem %s0, 9
    %v85 = vld [vmem:[%s84] sm:$0x1]
    %86 = vrot.lane.b32.xlu0 %v85, 54
    %v87 = vpop.permute.xlu0 %86
    %vm88 = vcmask 490928
    %89 = vst.msk [vmem:[#allocation0] sm:$0x1] %vm88, %v87
    %s90 = scalar_lea.vmem %s0, 8
    %v91 = vld [vmem:[%s90] sm:$0x1]
    %92 = vrot.lane.b32.xlu0 %v91, 48
    %v93 = vpop.permute.xlu0 %92
    %vm94 = vcmask 441728
    %95 = vst.msk [vmem:[#allocation0] sm:$0x1] %vm94, %v93
    %s96 = scalar_lea.vmem %s0, 7
    %v97 = vld [vmem:[%s96] sm:$0x1]
    %98 = vrot.lane.b32.xlu0 %v97, 42
    %v99 = vpop.permute.xlu0 %98
    %vm100 = vcmask 392528
    %101 = vst.msk [vmem:[#allocation0] sm:$0x1] %vm100, %v99
    %s102 = scalar_lea.vmem %s0, 6
    %v103 = vld [vmem:[%s102] sm:$0x1]
    %104 = vrot.lane.b32.xlu0 %v103, 36
    %v105 = vpop.permute.xlu0 %104
    %vm106 = vcmask 343328
    %107 = vst.msk [vmem:[#allocation0] sm:$0x1] %vm106, %v105
    %s108 = scalar_lea.vmem %s0, 5
    %v109 = vld [vmem:[%s108] sm:$0x1]
    %110 = vrot.lane.b32.xlu0 %v109, 30
    %v111 = vpop.permute.xlu0 %110
    %vm112 = vcmask 294128
    %113 = vst.msk [vmem:[#allocation0] sm:$0x1] %vm112, %v111
    %s114 = scalar_lea.vmem %s0, 4
    %v115 = vld [vmem:[%s114] sm:$0x1]
    %116 = vrot.lane.b32.xlu0 %v115, 24
    %v117 = vpop.permute.xlu0 %116
    %vm118 = vcmask 244928
    %119 = vst.msk [vmem:[#allocation0] sm:$0x1] %vm118, %v117
    %s120 = scalar_lea.vmem %s0, 3
    %v121 = vld [vmem:[%s120] sm:$0x1]
    %122 = vrot.lane.b32.xlu0 %v121, 18
    %v123 = vpop.permute.xlu0 %122
    %vm124 = vcmask 195728
    %125 = vst.msk [vmem:[#allocation0] sm:$0x1] %vm124, %v123
    %s126 = scalar_lea.vmem %s0, 2
    %v127 = vld [vmem:[%s126] sm:$0x1]
    %128 = vrot.lane.b32.xlu0 %v127, 12
    %v129 = vpop.permute.xlu0 %128
    %vm130 = vcmask 146528
    %131 = vst.msk [vmem:[#allocation0] sm:$0x1] %vm130, %v129
    %s132 = scalar_lea.vmem %s0, 23
    %v133 = vld [vmem:[%s132] sm:$0x1]
    %134 = vrot.lane.b32.xlu0 %v133, 10
    %v135 = vpop.permute.xlu0 %134
    %vm136 = vcmask 130128
    %s137 = scalar_lea.vmem [#allocation0], 8
    %138 = vst.msk [vmem:[%s137] sm:$0x1] %vm136, %v135
    %s139 = scalar_lea.vmem %s0, 1
    %v140 = vld [vmem:[%s139] sm:$0x1]
    %141 = vrot.lane.b32.xlu0 %v140, 6
    %v142 = vpop.permute.xlu0 %141
    %vm143 = vcmask 97328
    %144 = vst.msk [vmem:[#allocation0] sm:$0x1] %vm143, %v142
    %s145 = scalar_lea.vmem %s0, 22
    %v146 = vld [vmem:[%s145] sm:$0x1]
    %147 = vrot.lane.b32.xlu0 %v146, 4
    %v148 = vpop.permute.xlu0 %147
    %vm149 = vcmask 80928
    %s150 = scalar_lea.vmem [#allocation0], 8
    %151 = vst.msk [vmem:[%s150] sm:$0x1] %vm149, %v148
    %s153 = ssub.s32 2, 1
    %v154 = vld [vmem:[#allocation0] sm:%s153]
    %s156 = ssub.s32 2, 1
    %157 = vst [vmem:[%s1] sm:%s156] %v154
    %s158 = scalar_lea.vmem [#allocation0], 8
    %v159 = vld [vmem:[%s158] sm:%s153]
    %s161 = ssub.s32 2, 1
    %s162 = scalar_lea.vmem %s1, 1
    %163 = vst [vmem:[%s162] sm:%s161] %v159

// kernel: tile.19
$region0: #{tile.19}
  %s0 = inlined_call_operand.vmem [shape: f32[8,16], index: 0, kind: input, shape index: {}]
  %s1 = inlined_call_operand.vmem [shape: f32[1,128], index: 1, kind: output, shape index: {}]
  $region1: #{tile.19} parent=0
    #allocation0 [shape = 'u8[4096]{0}', space=vmem, size = 0x1000, scoped, tag = 'scoped mem for output reshape']
    %v2 = vld [vmem:[%s0] sm:$0x1]
    %vm3 = vcmask 130048
    %4 = vst.msk [vmem:[#allocation0] sm:$0x1] %vm3, %v2
    %s5 = scalar_lea.vmem %s0, 7
    %v6 = vld [vmem:[%s5] sm:$0x1]
    %7 = vrot.lane.b32.xlu0 %v6, 112
    %v8 = vpop.permute.xlu0 %7
    %vm9 = vcmask 1048448
    %10 = vst.msk [vmem:[#allocation0] sm:$0x1] %vm9, %v8
    %s11 = scalar_lea.vmem %s0, 6
    %v12 = vld [vmem:[%s11] sm:$0x1]
    %13 = vrot.lane.b32.xlu0 %v12, 96
    %v14 = vpop.permute.xlu0 %13
    %vm15 = vcmask 917248
    %16 = vst.msk [vmem:[#allocation0] sm:$0x1] %vm15, %v14
    %s17 = scalar_lea.vmem %s0, 5
    %v18 = vld [vmem:[%s17] sm:$0x1]
    %19 = vrot.lane.b32.xlu0 %v18, 80
    %v20 = vpop.permute.xlu0 %19
    %vm21 = vcmask 786048
    %22 = vst.msk [vmem:[#allocation0] sm:$0x1] %vm21, %v20
    %s23 = scalar_lea.vmem %s0, 4
    %v24 = vld [vmem:[%s23] sm:$0x1]
    %25 = vrot.lane.b32.xlu0 %v24, 64
    %v26 = vpop.permute.xlu0 %25
    %vm27 = vcmask 654848
    %28 = vst.msk [vmem:[#allocation0] sm:$0x1] %vm27, %v26
    %s29 = scalar_lea.vmem %s0, 3
    %v30 = vld [vmem:[%s29] sm:$0x1]
    %31 = vrot.lane.b32.xlu0 %v30, 48
    %v32 = vpop.permute.xlu0 %31
    %vm33 = vcmask 523648
    %34 = vst.msk [vmem:[#allocation0] sm:$0x1] %vm33, %v32
    %s35 = scalar_lea.vmem %s0, 2
    %v36 = vld [vmem:[%s35] sm:$0x1]
    %37 = vrot.lane.b32.xlu0 %v36, 32
    %v38 = vpop.permute.xlu0 %37
    %vm39 = vcmask 392448
    %40 = vst.msk [vmem:[#allocation0] sm:$0x1] %vm39, %v38
    %s41 = scalar_lea.vmem %s0, 1
    %v42 = vld [vmem:[%s41] sm:$0x1]
    %43 = vrot.lane.b32.xlu0 %v42, 16
    %v44 = vpop.permute.xlu0 %43
    %vm45 = vcmask 261248
    %46 = vst.msk [vmem:[#allocation0] sm:$0x1] %vm45, %v44
    %s48 = ssub.s32 2, 1
    %v49 = vld [vmem:[#allocation0] sm:%s48]
    %s51 = ssub.s32 2, 1
    %52 = vst [vmem:[%s1] sm:%s51] %v49

// kernel: garment_forward.1
$region0: #{garment_forward.1}
  #allocation0 [shape = 'u32[]', space=smem, size = 0x4, offset = 0x4, fixed_abs, tag = 'smem constant byte address 0x4 - core index']
  #allocation1 [shape = 'u32[72,128]{1,0:T(1,128)}', space=vmem, size = 0x9000, scoped, tag = 'internal scratch']
  %s0 = inlined_call_operand.vmem [shape: f32[28,8,28], index: 0, kind: input, shape index: {}]
  %s1 = inlined_call_operand.vmem [shape: f32[5,28,144], index: 1, kind: input, shape index: {}]
  %s2 = inlined_call_operand.vmem [shape: f32[1,144], index: 2, kind: input, shape index: {}]
  %s3 = inlined_call_operand.vmem [shape: f32[5,138,128], index: 3, kind: input, shape index: {}]
  %s4 = inlined_call_operand.vmem [shape: f32[1,128], index: 4, kind: input, shape index: {}]
  %s5 = inlined_call_operand.vmem [shape: f32[4,112,120], index: 5, kind: input, shape index: {}]
  %s6 = inlined_call_operand.vmem [shape: f32[1,120], index: 6, kind: input, shape index: {}]
  %s7 = inlined_call_operand.vmem [shape: f32[120,84], index: 7, kind: input, shape index: {}]
  %s8 = inlined_call_operand.vmem [shape: f32[1,84], index: 8, kind: input, shape index: {}]
  %s9 = inlined_call_operand.vmem [shape: f32[84,10], index: 9, kind: input, shape index: {}]
  %s10 = inlined_call_operand.vmem [shape: f32[1,10], index: 10, kind: input, shape index: {}]
  %s11 = inlined_call_operand.vmem [shape: f32[8,20], index: 11, kind: output, shape index: {}]
  %s12 = sld [smem:[#allocation0]]
  $region54: #{garment_forward.1} parent=0
    _
  %s14 = ssub.s32 1, %s12
  %s15 = scalar_select 0, %s14, %s12
  // Predicated region
  $region2: #{garment_forward.1} parent=0 // pred_check
    _
  $region3: #{garment_forward.1} parent=0 // pred_check_branch
    %17 = sbr.rel (0) target = $region5
  $region4: #{garment_forward.1} parent=0 // pred_region
    _
  $region5: #{garment_forward.1} parent=0 // pred_fallthru
    _
  // Predicated region
  $region6: #{garment_forward.1} parent=0 // pred_check
    _
  $region7: #{garment_forward.1} parent=0 // pred_check_branch
    %19 = sbr.rel (0) target = $region9
  $region8: #{garment_forward.1} parent=0 // pred_region
    _
  $region9: #{garment_forward.1} parent=0 // pred_fallthru
    _
  // Predicated region
  $region10: #{garment_forward.1} parent=0 // pred_check
    _
  $region11: #{garment_forward.1} parent=0 // pred_check_branch
    %21 = sbr.rel (0) target = $region13
  $region12: #{garment_forward.1} parent=0 // pred_region
    _
  $region13: #{garment_forward.1} parent=0 // pred_fallthru
    _
  // Predicated region
  $region14: #{garment_forward.1} parent=0 // pred_check
    _
  $region15: #{garment_forward.1} parent=0 // pred_check_branch
    %23 = sbr.rel (0) target = $region17
  $region16: #{garment_forward.1} parent=0 // pred_region
    _
  $region17: #{garment_forward.1} parent=0 // pred_fallthru
    _
  // Predicated region
  $region18: #{garment_forward.1} parent=0 // pred_check
    _
  $region19: #{garment_forward.1} parent=0 // pred_check_branch
    %25 = sbr.rel (0) target = $region21
  $region20: #{garment_forward.1} parent=0 // pred_region
    _
  $region21: #{garment_forward.1} parent=0 // pred_fallthru
    _
  // Predicated region
  $region22: #{garment_forward.1} parent=0 // pred_check
    _
  $region23: #{garment_forward.1} parent=0 // pred_check_branch
    %27 = sbr.rel (0) target = $region25
  $region24: #{garment_forward.1} parent=0 // pred_region
    _
  $region25: #{garment_forward.1} parent=0 // pred_fallthru
    _
  // Predicated region
  $region26: #{garment_forward.1} parent=0 // pred_check
    _
  $region27: #{garment_forward.1} parent=0 // pred_check_branch
    %29 = sbr.rel (0) target = $region29
  $region28: #{garment_forward.1} parent=0 // pred_region
    _
  $region29: #{garment_forward.1} parent=0 // pred_fallthru
    _
  // Predicated region
  $region30: #{garment_forward.1} parent=0 // pred_check
    _
  $region31: #{garment_forward.1} parent=0 // pred_check_branch
    %31 = sbr.rel (0) target = $region33
  $region32: #{garment_forward.1} parent=0 // pred_region
    _
  $region33: #{garment_forward.1} parent=0 // pred_fallthru
    _
  // Predicated region
  $region34: #{garment_forward.1} parent=0 // pred_check
    _
  $region35: #{garment_forward.1} parent=0 // pred_check_branch
    %33 = sbr.rel (0) target = $region37
  $region36: #{garment_forward.1} parent=0 // pred_region
    _
  $region37: #{garment_forward.1} parent=0 // pred_fallthru
    _
  // Predicated region
  $region38: #{garment_forward.1} parent=0 // pred_check
    _
  $region39: #{garment_forward.1} parent=0 // pred_check_branch
    %35 = sbr.rel (0) target = $region41
  $region40: #{garment_forward.1} parent=0 // pred_region
    _
  $region41: #{garment_forward.1} parent=0 // pred_fallthru
    _
  // Predicated region
  $region42: #{garment_forward.1} parent=0 // pred_check
    _
  $region43: #{garment_forward.1} parent=0 // pred_check_branch
    %37 = sbr.rel (0) target = $region45
  $region44: #{garment_forward.1} parent=0 // pred_region
    _
  $region45: #{garment_forward.1} parent=0 // pred_fallthru
    _
  %v38 = vld [vmem:[%s0] sm:$0xff]
  %v39 = vld [vmem:[%s0 + $0x8] sm:$0xff]
  %v40 = vld [vmem:[%s0 + $0x10] sm:$0xff]
  %v41 = vld [vmem:[%s0 + $0x18] sm:$0xff]
  %v42 = vld [vmem:[%s0 + $0x20] sm:$0xff]
  %v43 = vld [vmem:[%s0 + $0x28] sm:$0xff]
  %v44 = vld [vmem:[%s0 + $0x30] sm:$0xff]
  %v45 = vld [vmem:[%s0 + $0x38] sm:$0xff]
  %v46 = vld [vmem:[%s0 + $0x40] sm:$0xff]
  %v47 = vld [vmem:[%s0 + $0x48] sm:$0xff]
  %v48 = vld [vmem:[%s0 + $0x50] sm:$0xff]
  %v49 = vld [vmem:[%s0 + $0x58] sm:$0xff]
  %v50 = vld [vmem:[%s0 + $0x60] sm:$0xff]
  %v51 = vld [vmem:[%s0 + $0x68] sm:$0xff]
  %v52 = vld [vmem:[%s0 + $0x70] sm:$0xff]
  %v53 = vld [vmem:[%s0 + $0x78] sm:$0xff]
  %v54 = vld [vmem:[%s0 + $0x80] sm:$0xff]
  %v55 = vld [vmem:[%s0 + $0x88] sm:$0xff]
  %v56 = vld [vmem:[%s0 + $0x90] sm:$0xff]
  %v57 = vld [vmem:[%s0 + $0x98] sm:$0xff]
  %v58 = vld [vmem:[%s0 + $0xa0] sm:$0xff]
  %v59 = vld [vmem:[%s0 + $0xa8] sm:$0xff]
  %v60 = vld [vmem:[%s0 + $0xb0] sm:$0xff]
  %v61 = vld [vmem:[%s0 + $0xb8] sm:$0xff]
  %v62 = vld [vmem:[%s0 + $0xc0] sm:$0xff]
  %v63 = vld [vmem:[%s0 + $0xc8] sm:$0xff]
  %v64 = vld [vmem:[%s0 + $0xd0] sm:$0xff]
  %v65 = vld [vmem:[%s0 + $0xd8] sm:$0xff]
  %v66 = vld [vmem:[%s1] sm:$0xff]
  %v67 = vld [vmem:[%s1 + $0x8] sm:$0xff]
  %v68 = vld [vmem:[%s1 + $0x10] sm:$0xff]
  %v69 = vld [vmem:[%s1 + $0x18] sm:$0xff]
  %v70 = vld [vmem:[%s1 + $0x20] sm:$0xff]
  %v71 = vld [vmem:[%s1 + $0x28] sm:$0xff]
  %v72 = vld [vmem:[%s1 + $0x30] sm:$0xf]
  %v73 = vld [vmem:[%s1 + $0x38] sm:$0xf]
  %s74 = scalar_lea.vmem %s1, 64
  %v75 = vld [vmem:[%s74] sm:$0xff]
  %v76 = vld [vmem:[%s74 + $0x8] sm:$0xff]
  %v77 = vld [vmem:[%s74 + $0x10] sm:$0xff]
  %v78 = vld [vmem:[%s74 + $0x18] sm:$0xff]
  %v79 = vld [vmem:[%s74 + $0x20] sm:$0xff]
  %v80 = vld [vmem:[%s74 + $0x28] sm:$0xff]
  %v81 = vld [vmem:[%s74 + $0x30] sm:$0xf]
  %v82 = vld [vmem:[%s74 + $0x38] sm:$0xf]
  %vm83 = vcmask 228352
  %v85 = vsel %vm83, %v39, 0
  %v88 = vsel %vm83, %v40, 0
  %v91 = vsel %vm83, %v41, 0
  %v94 = vsel %vm83, %v42, 0
  %v97 = vsel %vm83, %v43, 0
  %v100 = vsel %vm83, %v44, 0
  %v103 = vsel %vm83, %v45, 0
  %v106 = vsel %vm83, %v46, 0
  %v109 = vsel %vm83, %v47, 0
  %v112 = vsel %vm83, %v48, 0
  %v115 = vsel %vm83, %v49, 0
  %v118 = vsel %vm83, %v50, 0
  %v121 = vsel %vm83, %v51, 0
  %v124 = vsel %vm83, %v52, 0
  %v127 = vsel %vm83, %v53, 0
  %v130 = vsel %vm83, %v54, 0
  %v133 = vsel %vm83, %v55, 0
  %v136 = vsel %vm83, %v56, 0
  %v139 = vsel %vm83, %v57, 0
  %v142 = vsel %vm83, %v58, 0
  %v145 = vsel %vm83, %v59, 0
  %v148 = vsel %vm83, %v60, 0
  %v151 = vsel %vm83, %v61, 0
  %v154 = vsel %vm83, %v62, 0
  %vm156 = vcmask 1043456
  %v158 = vsel %vm156, %v81, 0
  %v161 = vsel %vm156, %v82, 0
  %163 = vmatpush.msra.mxu0 0.0
  %164 = vmatpush.msra.mxu0 0.0
  %165 = vmatpush.msra.mxu0 0.0
  %166 = vmatpush.msra.mxu0 0.0
  %167 = vmatpush.msra.mxu0 0.0
  %168 = vmatpush.msra.mxu0 0.0
  %169 = vmatpush.msra.mxu0 0.0
  %170 = vmatpush.msra.mxu0 0.0
  %171 = vmatpush.msra.mxu0 0.0
  %172 = vmatpush.msra.mxu0 0.0
  %173 = vmatpush.msra.mxu0 0.0
  %174 = vmatpush.msra.mxu0 0.0
  %175 = vmatpush.msra.mxu0 %v158
  %176 = vmatpush.msra.mxu0 %v79
  %177 = vmatpush.msra.mxu0 %v77
  %178 = vmatpush.msra.mxu0 %v75
  %179 = vmatmul.f32.gmra.mxu0 %v85
  %v180 = vpop.f32.mrf.mxu0
  %v181 = vadd.f32 0.0, %v180
  %182 = vmatmul.f32.gmra.mxu0 %v88
  %v183 = vpop.f32.mrf.mxu0
  %v184 = vadd.f32 0.0, %v183
  %185 = vmatmul.f32.gmra.mxu0 %v91
  %v186 = vpop.f32.mrf.mxu0
  %v187 = vadd.f32 0.0, %v186
  %188 = vmatmul.f32.gmra.mxu0 %v94
  %v189 = vpop.f32.mrf.mxu0
  %v190 = vadd.f32 0.0, %v189
  %191 = vmatmul.f32.gmra.mxu0 %v97
  %v192 = vpop.f32.mrf.mxu0
  %v193 = vadd.f32 0.0, %v192
  %194 = vmatmul.f32.gmra.mxu0 %v100
  %v195 = vpop.f32.mrf.mxu0
  %v196 = vadd.f32 0.0, %v195
  %197 = vmatmul.f32.gmra.mxu0 %v103
  %v198 = vpop.f32.mrf.mxu0
  %v199 = vadd.f32 0.0, %v198
  %200 = vmatmul.f32.gmra.mxu0 %v106
  %v201 = vpop.f32.mrf.mxu0
  %v202 = vadd.f32 0.0, %v201
  %203 = vmatmul.f32.gmra.mxu0 %v109
  %v204 = vpop.f32.mrf.mxu0
  %v205 = vadd.f32 0.0, %v204
  %206 = vmatmul.f32.gmra.mxu0 %v112
  %v207 = vpop.f32.mrf.mxu0
  %v208 = vadd.f32 0.0, %v207
  %209 = vmatmul.f32.gmra.mxu0 %v115
  %v210 = vpop.f32.mrf.mxu0
  %v211 = vadd.f32 0.0, %v210
  %212 = vmatmul.f32.gmra.mxu0 %v118
  %v213 = vpop.f32.mrf.mxu0
  %v214 = vadd.f32 0.0, %v213
  %215 = vmatmul.f32.gmra.mxu0 %v121
  %v216 = vpop.f32.mrf.mxu0
  %v217 = vadd.f32 0.0, %v216
  %218 = vmatmul.f32.gmra.mxu0 %v124
  %v219 = vpop.f32.mrf.mxu0
  %v220 = vadd.f32 0.0, %v219
  %221 = vmatmul.f32.gmra.mxu0 %v127
  %v222 = vpop.f32.mrf.mxu0
  %v223 = vadd.f32 0.0, %v222
  %224 = vmatmul.f32.gmra.mxu0 %v130
  %v225 = vpop.f32.mrf.mxu0
  %v226 = vadd.f32 0.0, %v225
  %227 = vmatmul.f32.gmra.mxu0 %v133
  %v228 = vpop.f32.mrf.mxu0
  %v229 = vadd.f32 0.0, %v228
  %230 = vmatmul.f32.gmra.mxu0 %v136
  %v231 = vpop.f32.mrf.mxu0
  %v232 = vadd.f32 0.0, %v231
  %233 = vmatmul.f32.gmra.mxu0 %v139
  %v234 = vpop.f32.mrf.mxu0
  %v235 = vadd.f32 0.0, %v234
  %236 = vmatmul.f32.gmra.mxu0 %v142
  %v237 = vpop.f32.mrf.mxu0
  %v238 = vadd.f32 0.0, %v237
  %239 = vmatmul.f32.gmra.mxu0 %v145
  %v240 = vpop.f32.mrf.mxu0
  %v241 = vadd.f32 0.0, %v240
  %242 = vmatmul.f32.gmra.mxu0 %v148
  %v243 = vpop.f32.mrf.mxu0
  %v244 = vadd.f32 0.0, %v243
  %245 = vmatmul.f32.gmra.mxu0 %v151
  %v246 = vpop.f32.mrf.mxu0
  %v247 = vadd.f32 0.0, %v246
  %248 = vmatmul.f32.gmra.mxu0 %v154
  %v249 = vpop.f32.mrf.mxu0
  %v250 = vadd.f32 0.0, %v249
  %251 = vdwg.mxu0
  %252 = vmatpush.msra.mxu0 0.0
  %253 = vmatpush.msra.mxu0 0.0
  %254 = vmatpush.msra.mxu0 0.0
  %255 = vmatpush.msra.mxu0 0.0
  %256 = vmatpush.msra.mxu0 0.0
  %257 = vmatpush.msra.mxu0 0.0
  %258 = vmatpush.msra.mxu0 0.0
  %259 = vmatpush.msra.mxu0 0.0
  %260 = vmatpush.msra.mxu0 0.0
  %261 = vmatpush.msra.mxu0 0.0
  %262 = vmatpush.msra.mxu0 0.0
  %263 = vmatpush.msra.mxu0 0.0
  %264 = vmatpush.msra.mxu0 %v161
  %265 = vmatpush.msra.mxu0 %v80
  %266 = vmatpush.msra.mxu0 %v78
  %267 = vmatpush.msra.mxu0 %v76
  %268 = vmatmul.f32.gmra.mxu0 %v85
  %v269 = vpop.f32.mrf.mxu0
  %v270 = vadd.f32 0.0, %v269
  %271 = vmatmul.f32.gmra.mxu0 %v88
  %v272 = vpop.f32.mrf.mxu0
  %v273 = vadd.f32 0.0, %v272
  %274 = vmatmul.f32.gmra.mxu0 %v91
  %v275 = vpop.f32.mrf.mxu0
  %v276 = vadd.f32 0.0, %v275
  %277 = vmatmul.f32.gmra.mxu0 %v94
  %v278 = vpop.f32.mrf.mxu0
  %v279 = vadd.f32 0.0, %v278
  %280 = vmatmul.f32.gmra.mxu0 %v97
  %v281 = vpop.f32.mrf.mxu0
  %v282 = vadd.f32 0.0, %v281
  %283 = vmatmul.f32.gmra.mxu0 %v100
  %v284 = vpop.f32.mrf.mxu0
  %v285 = vadd.f32 0.0, %v284
  %286 = vmatmul.f32.gmra.mxu0 %v103
  %v287 = vpop.f32.mrf.mxu0
  %v288 = vadd.f32 0.0, %v287
  %289 = vmatmul.f32.gmra.mxu0 %v106
  %v290 = vpop.f32.mrf.mxu0
  %v291 = vadd.f32 0.0, %v290
  %292 = vmatmul.f32.gmra.mxu0 %v109
  %v293 = vpop.f32.mrf.mxu0
  %v294 = vadd.f32 0.0, %v293
  %295 = vmatmul.f32.gmra.mxu0 %v112
  %v296 = vpop.f32.mrf.mxu0
  %v297 = vadd.f32 0.0, %v296
  %298 = vmatmul.f32.gmra.mxu0 %v115
  %v299 = vpop.f32.mrf.mxu0
  %v300 = vadd.f32 0.0, %v299
  %301 = vmatmul.f32.gmra.mxu0 %v118
  %v302 = vpop.f32.mrf.mxu0
  %v303 = vadd.f32 0.0, %v302
  %304 = vmatmul.f32.gmra.mxu0 %v121
  %v305 = vpop.f32.mrf.mxu0
  %v306 = vadd.f32 0.0, %v305
  %307 = vmatmul.f32.gmra.mxu0 %v124
  %v308 = vpop.f32.mrf.mxu0
  %v309 = vadd.f32 0.0, %v308
  %310 = vmatmul.f32.gmra.mxu0 %v127
  %v311 = vpop.f32.mrf.mxu0
  %v312 = vadd.f32 0.0, %v311
  %313 = vmatmul.f32.gmra.mxu0 %v130
  %v314 = vpop.f32.mrf.mxu0
  %v315 = vadd.f32 0.0, %v314
  %316 = vmatmul.f32.gmra.mxu0 %v133
  %v317 = vpop.f32.mrf.mxu0
  %v318 = vadd.f32 0.0, %v317
  %319 = vmatmul.f32.gmra.mxu0 %v136
  %v320 = vpop.f32.mrf.mxu0
  %v321 = vadd.f32 0.0, %v320
  %322 = vmatmul.f32.gmra.mxu0 %v139
  %v323 = vpop.f32.mrf.mxu0
  %v324 = vadd.f32 0.0, %v323
  %325 = vmatmul.f32.gmra.mxu0 %v142
  %v326 = vpop.f32.mrf.mxu0
  %v327 = vadd.f32 0.0, %v326
  %328 = vmatmul.f32.gmra.mxu0 %v145
  %v329 = vpop.f32.mrf.mxu0
  %v330 = vadd.f32 0.0, %v329
  %331 = vmatmul.f32.gmra.mxu0 %v148
  %v332 = vpop.f32.mrf.mxu0
  %v333 = vadd.f32 0.0, %v332
  %334 = vmatmul.f32.gmra.mxu0 %v151
  %v335 = vpop.f32.mrf.mxu0
  %v336 = vadd.f32 0.0, %v335
  %337 = vmatmul.f32.gmra.mxu0 %v154
  %v338 = vpop.f32.mrf.mxu0
  %v339 = vadd.f32 0.0, %v338
  %340 = vdwg.mxu0
  %v342 = vsel %vm83, %v38, 0
  %v345 = vsel %vm156, %v72, 0
  %v348 = vsel %vm156, %v73, 0
  %350 = vmatpush.msra.mxu0 0.0
  %351 = vmatpush.msra.mxu0 0.0
  %352 = vmatpush.msra.mxu0 0.0
  %353 = vmatpush.msra.mxu0 0.0
  %354 = vmatpush.msra.mxu0 0.0
  %355 = vmatpush.msra.mxu0 0.0
  %356 = vmatpush.msra.mxu0 0.0
  %357 = vmatpush.msra.mxu0 0.0
  %358 = vmatpush.msra.mxu0 0.0
  %359 = vmatpush.msra.mxu0 0.0
  %360 = vmatpush.msra.mxu0 0.0
  %361 = vmatpush.msra.mxu0 0.0
  %362 = vmatpush.msra.mxu0 %v345
  %363 = vmatpush.msra.mxu0 %v70
  %364 = vmatpush.msra.mxu0 %v68
  %365 = vmatpush.msra.mxu0 %v66
  %366 = vmatmul.f32.gmra.mxu0 %v342
  %v367 = vpop.f32.mrf.mxu0
  %v368 = vadd.f32 %v181, %v367
  %369 = vmatmul.f32.gmra.mxu0 %v85
  %v370 = vpop.f32.mrf.mxu0
  %v371 = vadd.f32 %v184, %v370
  %372 = vmatmul.f32.gmra.mxu0 %v88
  %v373 = vpop.f32.mrf.mxu0
  %v374 = vadd.f32 %v187, %v373
  %375 = vmatmul.f32.gmra.mxu0 %v91
  %v376 = vpop.f32.mrf.mxu0
  %v377 = vadd.f32 %v190, %v376
  %378 = vmatmul.f32.gmra.mxu0 %v94
  %v379 = vpop.f32.mrf.mxu0
  %v380 = vadd.f32 %v193, %v379
  %381 = vmatmul.f32.gmra.mxu0 %v97
  %v382 = vpop.f32.mrf.mxu0
  %v383 = vadd.f32 %v196, %v382
  %384 = vmatmul.f32.gmra.mxu0 %v100
  %v385 = vpop.f32.mrf.mxu0
  %v386 = vadd.f32 %v199, %v385
  %387 = vmatmul.f32.gmra.mxu0 %v103
  %v388 = vpop.f32.mrf.mxu0
  %v389 = vadd.f32 %v202, %v388
  %390 = vmatmul.f32.gmra.mxu0 %v106
  %v391 = vpop.f32.mrf.mxu0
  %v392 = vadd.f32 %v205, %v391
  %393 = vmatmul.f32.gmra.mxu0 %v109
  %v394 = vpop.f32.mrf.mxu0
  %v395 = vadd.f32 %v208, %v394
  %396 = vmatmul.f32.gmra.mxu0 %v112
  %v397 = vpop.f32.mrf.mxu0
  %v398 = vadd.f32 %v211, %v397
  %399 = vmatmul.f32.gmra.mxu0 %v115
  %v400 = vpop.f32.mrf.mxu0
  %v401 = vadd.f32 %v214, %v400
  %402 = vmatmul.f32.gmra.mxu0 %v118
  %v403 = vpop.f32.mrf.mxu0
  %v404 = vadd.f32 %v217, %v403
  %405 = vmatmul.f32.gmra.mxu0 %v121
  %v406 = vpop.f32.mrf.mxu0
  %v407 = vadd.f32 %v220, %v406
  %408 = vmatmul.f32.gmra.mxu0 %v124
  %v409 = vpop.f32.mrf.mxu0
  %v410 = vadd.f32 %v223, %v409
  %411 = vmatmul.f32.gmra.mxu0 %v127
  %v412 = vpop.f32.mrf.mxu0
  %v413 = vadd.f32 %v226, %v412
  %414 = vmatmul.f32.gmra.mxu0 %v130
  %v415 = vpop.f32.mrf.mxu0
  %v416 = vadd.f32 %v229, %v415
  %417 = vmatmul.f32.gmra.mxu0 %v133
  %v418 = vpop.f32.mrf.mxu0
  %v419 = vadd.f32 %v232, %v418
  %420 = vmatmul.f32.gmra.mxu0 %v136
  %v421 = vpop.f32.mrf.mxu0
  %v422 = vadd.f32 %v235, %v421
  %423 = vmatmul.f32.gmra.mxu0 %v139
  %v424 = vpop.f32.mrf.mxu0
  %v425 = vadd.f32 %v238, %v424
  %426 = vmatmul.f32.gmra.mxu0 %v142
  %v427 = vpop.f32.mrf.mxu0
  %v428 = vadd.f32 %v241, %v427
  %429 = vmatmul.f32.gmra.mxu0 %v145
  %v430 = vpop.f32.mrf.mxu0
  %v431 = vadd.f32 %v244, %v430
  %432 = vmatmul.f32.gmra.mxu0 %v148
  %v433 = vpop.f32.mrf.mxu0
  %v434 = vadd.f32 %v247, %v433
  %435 = vmatmul.f32.gmra.mxu0 %v151
  %v436 = vpop.f32.mrf.mxu0
  %v437 = vadd.f32 %v250, %v436
  %438 = vdwg.mxu0
  %439 = vmatpush.msra.mxu0 0.0
  %440 = vmatpush.msra.mxu0 0.0
  %441 = vmatpush.msra.mxu0 0.0
  %442 = vmatpush.msra.mxu0 0.0
  %443 = vmatpush.msra.mxu0 0.0
  %444 = vmatpush.msra.mxu0 0.0
  %445 = vmatpush.msra.mxu0 0.0
  %446 = vmatpush.msra.mxu0 0.0
  %447 = vmatpush.msra.mxu0 0.0
  %448 = vmatpush.msra.mxu0 0.0
  %449 = vmatpush.msra.mxu0 0.0
  %450 = vmatpush.msra.mxu0 0.0
  %451 = vmatpush.msra.mxu0 %v348
  %452 = vmatpush.msra.mxu0 %v71
  %453 = vmatpush.msra.mxu0 %v69
  %454 = vmatpush.msra.mxu0 %v67
  %455 = vmatmul.f32.gmra.mxu0 %v342
  %v456 = vpop.f32.mrf.mxu0
  %v457 = vadd.f32 %v270, %v456
  %458 = vmatmul.f32.gmra.mxu0 %v85
  %v459 = vpop.f32.mrf.mxu0
  %v460 = vadd.f32 %v273, %v459
  %461 = vmatmul.f32.gmra.mxu0 %v88
  %v462 = vpop.f32.mrf.mxu0
  %v463 = vadd.f32 %v276, %v462
  %464 = vmatmul.f32.gmra.mxu0 %v91
  %v465 = vpop.f32.mrf.mxu0
  %v466 = vadd.f32 %v279, %v465
  %467 = vmatmul.f32.gmra.mxu0 %v94
  %v468 = vpop.f32.mrf.mxu0
  %v469 = vadd.f32 %v282, %v468
  %470 = vmatmul.f32.gmra.mxu0 %v97
  %v471 = vpop.f32.mrf.mxu0
  %v472 = vadd.f32 %v285, %v471
  %473 = vmatmul.f32.gmra.mxu0 %v100
  %v474 = vpop.f32.mrf.mxu0
  %v475 = vadd.f32 %v288, %v474
  %476 = vmatmul.f32.gmra.mxu0 %v103
  %v477 = vpop.f32.mrf.mxu0
  %v478 = vadd.f32 %v291, %v477
  %479 = vmatmul.f32.gmra.mxu0 %v106
  %v480 = vpop.f32.mrf.mxu0
  %v481 = vadd.f32 %v294, %v480
  %482 = vmatmul.f32.gmra.mxu0 %v109
  %v483 = vpop.f32.mrf.mxu0
  %v484 = vadd.f32 %v297, %v483
  %485 = vmatmul.f32.gmra.mxu0 %v112
  %v486 = vpop.f32.mrf.mxu0
  %v487 = vadd.f32 %v300, %v486
  %488 = vmatmul.f32.gmra.mxu0 %v115
  %v489 = vpop.f32.mrf.mxu0
  %v490 = vadd.f32 %v303, %v489
  %491 = vmatmul.f32.gmra.mxu0 %v118
  %v492 = vpop.f32.mrf.mxu0
  %v493 = vadd.f32 %v306, %v492
  %494 = vmatmul.f32.gmra.mxu0 %v121
  %v495 = vpop.f32.mrf.mxu0
  %v496 = vadd.f32 %v309, %v495
  %497 = vmatmul.f32.gmra.mxu0 %v124
  %v498 = vpop.f32.mrf.mxu0
  %v499 = vadd.f32 %v312, %v498
  %500 = vmatmul.f32.gmra.mxu0 %v127
  %v501 = vpop.f32.mrf.mxu0
  %v502 = vadd.f32 %v315, %v501
  %503 = vmatmul.f32.gmra.mxu0 %v130
  %v504 = vpop.f32.mrf.mxu0
  %v505 = vadd.f32 %v318, %v504
  %506 = vmatmul.f32.gmra.mxu0 %v133
  %v507 = vpop.f32.mrf.mxu0
  %v508 = vadd.f32 %v321, %v507
  %509 = vmatmul.f32.gmra.mxu0 %v136
  %v510 = vpop.f32.mrf.mxu0
  %v511 = vadd.f32 %v324, %v510
  %512 = vmatmul.f32.gmra.mxu0 %v139
  %v513 = vpop.f32.mrf.mxu0
  %v514 = vadd.f32 %v327, %v513
  %515 = vmatmul.f32.gmra.mxu0 %v142
  %v516 = vpop.f32.mrf.mxu0
  %v517 = vadd.f32 %v330, %v516
  %518 = vmatmul.f32.gmra.mxu0 %v145
  %v519 = vpop.f32.mrf.mxu0
  %v520 = vadd.f32 %v333, %v519
  %521 = vmatmul.f32.gmra.mxu0 %v148
  %v522 = vpop.f32.mrf.mxu0
  %v523 = vadd.f32 %v336, %v522
  %524 = vmatmul.f32.gmra.mxu0 %v151
  %v525 = vpop.f32.mrf.mxu0
  %v526 = vadd.f32 %v339, %v525
  %527 = vdwg.mxu0
  %s528 = scalar_lea.vmem %s1, 128
  %v529 = vld [vmem:[%s528] sm:$0xff]
  %v530 = vld [vmem:[%s528 + $0x8] sm:$0xff]
  %v531 = vld [vmem:[%s528 + $0x10] sm:$0xff]
  %v532 = vld [vmem:[%s528 + $0x18] sm:$0xff]
  %v533 = vld [vmem:[%s528 + $0x20] sm:$0xff]
  %v534 = vld [vmem:[%s528 + $0x28] sm:$0xff]
  %v535 = vld [vmem:[%s528 + $0x30] sm:$0xf]
  %v536 = vld [vmem:[%s528 + $0x38] sm:$0xf]
  %v538 = vsel %vm83, %v63, 0
  %v541 = vsel %vm156, %v535, 0
  %v544 = vsel %vm156, %v536, 0
  %546 = vmatpush.msra.mxu0 0.0
  %547 = vmatpush.msra.mxu0 0.0
  %548 = vmatpush.msra.mxu0 0.0
  %549 = vmatpush.msra.mxu0 0.0
  %550 = vmatpush.msra.mxu0 0.0
  %551 = vmatpush.msra.mxu0 0.0
  %552 = vmatpush.msra.mxu0 0.0
  %553 = vmatpush.msra.mxu0 0.0
  %554 = vmatpush.msra.mxu0 0.0
  %555 = vmatpush.msra.mxu0 0.0
  %556 = vmatpush.msra.mxu0 0.0
  %557 = vmatpush.msra.mxu0 0.0
  %558 = vmatpush.msra.mxu0 %v541
  %559 = vmatpush.msra.mxu0 %v533
  %560 = vmatpush.msra.mxu0 %v531
  %561 = vmatpush.msra.mxu0 %v529
  %562 = vmatmul.f32.gmra.mxu0 %v88
  %v563 = vpop.f32.mrf.mxu0
  %v564 = vadd.f32 0.0, %v563
  %565 = vmatmul.f32.gmra.mxu0 %v91
  %v566 = vpop.f32.mrf.mxu0
  %v567 = vadd.f32 0.0, %v566
  %568 = vmatmul.f32.gmra.mxu0 %v94
  %v569 = vpop.f32.mrf.mxu0
  %v570 = vadd.f32 0.0, %v569
  %571 = vmatmul.f32.gmra.mxu0 %v97
  %v572 = vpop.f32.mrf.mxu0
  %v573 = vadd.f32 0.0, %v572
  %574 = vmatmul.f32.gmra.mxu0 %v100
  %v575 = vpop.f32.mrf.mxu0
  %v576 = vadd.f32 0.0, %v575
  %577 = vmatmul.f32.gmra.mxu0 %v103
  %v578 = vpop.f32.mrf.mxu0
  %v579 = vadd.f32 0.0, %v578
  %580 = vmatmul.f32.gmra.mxu0 %v106
  %v581 = vpop.f32.mrf.mxu0
  %v582 = vadd.f32 0.0, %v581
  %583 = vmatmul.f32.gmra.mxu0 %v109
  %v584 = vpop.f32.mrf.mxu0
  %v585 = vadd.f32 0.0, %v584
  %586 = vmatmul.f32.gmra.mxu0 %v112
  %v587 = vpop.f32.mrf.mxu0
  %v588 = vadd.f32 0.0, %v587
  %589 = vmatmul.f32.gmra.mxu0 %v115
  %v590 = vpop.f32.mrf.mxu0
  %v591 = vadd.f32 0.0, %v590
  %592 = vmatmul.f32.gmra.mxu0 %v118
  %v593 = vpop.f32.mrf.mxu0
  %v594 = vadd.f32 0.0, %v593
  %595 = vmatmul.f32.gmra.mxu0 %v121
  %v596 = vpop.f32.mrf.mxu0
  %v597 = vadd.f32 0.0, %v596
  %598 = vmatmul.f32.gmra.mxu0 %v124
  %v599 = vpop.f32.mrf.mxu0
  %v600 = vadd.f32 0.0, %v599
  %601 = vmatmul.f32.gmra.mxu0 %v127
  %v602 = vpop.f32.mrf.mxu0
  %v603 = vadd.f32 0.0, %v602
  %604 = vmatmul.f32.gmra.mxu0 %v130
  %v605 = vpop.f32.mrf.mxu0
  %v606 = vadd.f32 0.0, %v605
  %607 = vmatmul.f32.gmra.mxu0 %v133
  %v608 = vpop.f32.mrf.mxu0
  %v609 = vadd.f32 0.0, %v608
  %610 = vmatmul.f32.gmra.mxu0 %v136
  %v611 = vpop.f32.mrf.mxu0
  %v612 = vadd.f32 0.0, %v611
  %613 = vmatmul.f32.gmra.mxu0 %v139
  %v614 = vpop.f32.mrf.mxu0
  %v615 = vadd.f32 0.0, %v614
  %616 = vmatmul.f32.gmra.mxu0 %v142
  %v617 = vpop.f32.mrf.mxu0
  %v618 = vadd.f32 0.0, %v617
  %619 = vmatmul.f32.gmra.mxu0 %v145
  %v620 = vpop.f32.mrf.mxu0
  %v621 = vadd.f32 0.0, %v620
  %622 = vmatmul.f32.gmra.mxu0 %v148
  %v623 = vpop.f32.mrf.mxu0
  %v624 = vadd.f32 0.0, %v623
  %625 = vmatmul.f32.gmra.mxu0 %v151
  %v626 = vpop.f32.mrf.mxu0
  %v627 = vadd.f32 0.0, %v626
  %628 = vmatmul.f32.gmra.mxu0 %v154
  %v629 = vpop.f32.mrf.mxu0
  %v630 = vadd.f32 0.0, %v629
  %631 = vmatmul.f32.gmra.mxu0 %v538
  %v632 = vpop.f32.mrf.mxu0
  %v633 = vadd.f32 0.0, %v632
  %634 = vdwg.mxu0
  %635 = vmatpush.msra.mxu0 0.0
  %636 = vmatpush.msra.mxu0 0.0
  %637 = vmatpush.msra.mxu0 0.0
  %638 = vmatpush.msra.mxu0 0.0
  %639 = vmatpush.msra.mxu0 0.0
  %640 = vmatpush.msra.mxu0 0.0
  %641 = vmatpush.msra.mxu0 0.0
  %642 = vmatpush.msra.mxu0 0.0
  %643 = vmatpush.msra.mxu0 0.0
  %644 = vmatpush.msra.mxu0 0.0
  %645 = vmatpush.msra.mxu0 0.0
  %646 = vmatpush.msra.mxu0 0.0
  %647 = vmatpush.msra.mxu0 %v544
  %648 = vmatpush.msra.mxu0 %v534
  %649 = vmatpush.msra.mxu0 %v532
  %650 = vmatpush.msra.mxu0 %v530
  %651 = vmatmul.f32.gmra.mxu0 %v88
  %v652 = vpop.f32.mrf.mxu0
  %v653 = vadd.f32 0.0, %v652
  %654 = vmatmul.f32.gmra.mxu0 %v91
  %v655 = vpop.f32.mrf.mxu0
  %v656 = vadd.f32 0.0, %v655
  %657 = vmatmul.f32.gmra.mxu0 %v94
  %v658 = vpop.f32.mrf.mxu0
  %v659 = vadd.f32 0.0, %v658
  %660 = vmatmul.f32.gmra.mxu0 %v97
  %v661 = vpop.f32.mrf.mxu0
  %v662 = vadd.f32 0.0, %v661
  %663 = vmatmul.f32.gmra.mxu0 %v100
  %v664 = vpop.f32.mrf.mxu0
  %v665 = vadd.f32 0.0, %v664
  %666 = vmatmul.f32.gmra.mxu0 %v103
  %v667 = vpop.f32.mrf.mxu0
  %v668 = vadd.f32 0.0, %v667
  %669 = vmatmul.f32.gmra.mxu0 %v106
  %v670 = vpop.f32.mrf.mxu0
  %v671 = vadd.f32 0.0, %v670
  %672 = vmatmul.f32.gmra.mxu0 %v109
  %v673 = vpop.f32.mrf.mxu0
  %v674 = vadd.f32 0.0, %v673
  %675 = vmatmul.f32.gmra.mxu0 %v112
  %v676 = vpop.f32.mrf.mxu0
  %v677 = vadd.f32 0.0, %v676
  %678 = vmatmul.f32.gmra.mxu0 %v115
  %v679 = vpop.f32.mrf.mxu0
  %v680 = vadd.f32 0.0, %v679
  %681 = vmatmul.f32.gmra.mxu0 %v118
  %v682 = vpop.f32.mrf.mxu0
  %v683 = vadd.f32 0.0, %v682
  %684 = vmatmul.f32.gmra.mxu0 %v121
  %v685 = vpop.f32.mrf.mxu0
  %v686 = vadd.f32 0.0, %v685
  %687 = vmatmul.f32.gmra.mxu0 %v124
  %v688 = vpop.f32.mrf.mxu0
  %v689 = vadd.f32 0.0, %v688
  %690 = vmatmul.f32.gmra.mxu0 %v127
  %v691 = vpop.f32.mrf.mxu0
  %v692 = vadd.f32 0.0, %v691
  %693 = vmatmul.f32.gmra.mxu0 %v130
  %v694 = vpop.f32.mrf.mxu0
  %v695 = vadd.f32 0.0, %v694
  %696 = vmatmul.f32.gmra.mxu0 %v133
  %v697 = vpop.f32.mrf.mxu0
  %v698 = vadd.f32 0.0, %v697
  %699 = vmatmul.f32.gmra.mxu0 %v136
  %v700 = vpop.f32.mrf.mxu0
  %v701 = vadd.f32 0.0, %v700
  %702 = vmatmul.f32.gmra.mxu0 %v139
  %v703 = vpop.f32.mrf.mxu0
  %v704 = vadd.f32 0.0, %v703
  %705 = vmatmul.f32.gmra.mxu0 %v142
  %v706 = vpop.f32.mrf.mxu0
  %v707 = vadd.f32 0.0, %v706
  %708 = vmatmul.f32.gmra.mxu0 %v145
  %v709 = vpop.f32.mrf.mxu0
  %v710 = vadd.f32 0.0, %v709
  %711 = vmatmul.f32.gmra.mxu0 %v148
  %v712 = vpop.f32.mrf.mxu0
  %v713 = vadd.f32 0.0, %v712
  %714 = vmatmul.f32.gmra.mxu0 %v151
  %v715 = vpop.f32.mrf.mxu0
  %v716 = vadd.f32 0.0, %v715
  %717 = vmatmul.f32.gmra.mxu0 %v154
  %v718 = vpop.f32.mrf.mxu0
  %v719 = vadd.f32 0.0, %v718
  %720 = vmatmul.f32.gmra.mxu0 %v538
  %v721 = vpop.f32.mrf.mxu0
  %v722 = vadd.f32 0.0, %v721
  %723 = vdwg.mxu0
  %v724 = vadd.f32 %v368, %v564
  %v725 = vadd.f32 %v457, %v653
  %v726 = vadd.f32 %v371, %v567
  %v727 = vadd.f32 %v460, %v656
  %v728 = vadd.f32 %v374, %v570
  %v729 = vadd.f32 %v463, %v659
  %v730 = vadd.f32 %v377, %v573
  %v731 = vadd.f32 %v466, %v662
  %v732 = vadd.f32 %v380, %v576
  %v733 = vadd.f32 %v469, %v665
  %v734 = vadd.f32 %v383, %v579
  %v735 = vadd.f32 %v472, %v668
  %v736 = vadd.f32 %v386, %v582
  %v737 = vadd.f32 %v475, %v671
  %v738 = vadd.f32 %v389, %v585
  %v739 = vadd.f32 %v478, %v674
  %v740 = vadd.f32 %v392, %v588
  %v741 = vadd.f32 %v481, %v677
  %v742 = vadd.f32 %v395, %v591
  %v743 = vadd.f32 %v484, %v680
  %v744 = vadd.f32 %v398, %v594
  %v745 = vadd.f32 %v487, %v683
  %v746 = vadd.f32 %v401, %v597
  %v747 = vadd.f32 %v490, %v686
  %v748 = vadd.f32 %v404, %v600
  %v749 = vadd.f32 %v493, %v689
  %v750 = vadd.f32 %v407, %v603
  %v751 = vadd.f32 %v496, %v692
  %v752 = vadd.f32 %v410, %v606
  %v753 = vadd.f32 %v499, %v695
  %v754 = vadd.f32 %v413, %v609
  %v755 = vadd.f32 %v502, %v698
  %v756 = vadd.f32 %v416, %v612
  %v757 = vadd.f32 %v505, %v701
  %v758 = vadd.f32 %v419, %v615
  %v759 = vadd.f32 %v508, %v704
  %v760 = vadd.f32 %v422, %v618
  %v761 = vadd.f32 %v511, %v707
  %v762 = vadd.f32 %v425, %v621
  %v763 = vadd.f32 %v514, %v710
  %v764 = vadd.f32 %v428, %v624
  %v765 = vadd.f32 %v517, %v713
  %v766 = vadd.f32 %v431, %v627
  %v767 = vadd.f32 %v520, %v716
  %v768 = vadd.f32 %v434, %v630
  %v769 = vadd.f32 %v523, %v719
  %v770 = vadd.f32 %v437, %v633
  %v771 = vadd.f32 %v526, %v722
  %s772 = scalar_lea.vmem %s1, 192
  %v773 = vld [vmem:[%s772] sm:$0xff]
  %v774 = vld [vmem:[%s772 + $0x8] sm:$0xff]
  %v775 = vld [vmem:[%s772 + $0x10] sm:$0xff]
  %v776 = vld [vmem:[%s772 + $0x18] sm:$0xff]
  %v777 = vld [vmem:[%s772 + $0x20] sm:$0xff]
  %v778 = vld [vmem:[%s772 + $0x28] sm:$0xff]
  %v779 = vld [vmem:[%s772 + $0x30] sm:$0xf]
  %v780 = vld [vmem:[%s772 + $0x38] sm:$0xf]
  %v782 = vsel %vm83, %v64, 0
  %v785 = vsel %vm156, %v779, 0
  %v788 = vsel %vm156, %v780, 0
  %790 = vmatpush.msra.mxu0 0.0
  %791 = vmatpush.msra.mxu0 0.0
  %792 = vmatpush.msra.mxu0 0.0
  %793 = vmatpush.msra.mxu0 0.0
  %794 = vmatpush.msra.mxu0 0.0
  %795 = vmatpush.msra.mxu0 0.0
  %796 = vmatpush.msra.mxu0 0.0
  %797 = vmatpush.msra.mxu0 0.0
  %798 = vmatpush.msra.mxu0 0.0
  %799 = vmatpush.msra.mxu0 0.0
  %800 = vmatpush.msra.mxu0 0.0
  %801 = vmatpush.msra.mxu0 0.0
  %802 = vmatpush.msra.mxu0 %v785
  %803 = vmatpush.msra.mxu0 %v777
  %804 = vmatpush.msra.mxu0 %v775
  %805 = vmatpush.msra.mxu0 %v773
  %806 = vmatmul.f32.gmra.mxu0 %v91
  %v807 = vpop.f32.mrf.mxu0
  %v808 = vadd.f32 0.0, %v807
  %809 = vmatmul.f32.gmra.mxu0 %v94
  %v810 = vpop.f32.mrf.mxu0
  %v811 = vadd.f32 0.0, %v810
  %812 = vmatmul.f32.gmra.mxu0 %v97
  %v813 = vpop.f32.mrf.mxu0
  %v814 = vadd.f32 0.0, %v813
  %815 = vmatmul.f32.gmra.mxu0 %v100
  %v816 = vpop.f32.mrf.mxu0
  %v817 = vadd.f32 0.0, %v816
  %818 = vmatmul.f32.gmra.mxu0 %v103
  %v819 = vpop.f32.mrf.mxu0
  %v820 = vadd.f32 0.0, %v819
  %821 = vmatmul.f32.gmra.mxu0 %v106
  %v822 = vpop.f32.mrf.mxu0
  %v823 = vadd.f32 0.0, %v822
  %824 = vmatmul.f32.gmra.mxu0 %v109
  %v825 = vpop.f32.mrf.mxu0
  %v826 = vadd.f32 0.0, %v825
  %827 = vmatmul.f32.gmra.mxu0 %v112
  %v828 = vpop.f32.mrf.mxu0
  %v829 = vadd.f32 0.0, %v828
  %830 = vmatmul.f32.gmra.mxu0 %v115
  %v831 = vpop.f32.mrf.mxu0
  %v832 = vadd.f32 0.0, %v831
  %833 = vmatmul.f32.gmra.mxu0 %v118
  %v834 = vpop.f32.mrf.mxu0
  %v835 = vadd.f32 0.0, %v834
  %836 = vmatmul.f32.gmra.mxu0 %v121
  %v837 = vpop.f32.mrf.mxu0
  %v838 = vadd.f32 0.0, %v837
  %839 = vmatmul.f32.gmra.mxu0 %v124
  %v840 = vpop.f32.mrf.mxu0
  %v841 = vadd.f32 0.0, %v840
  %842 = vmatmul.f32.gmra.mxu0 %v127
  %v843 = vpop.f32.mrf.mxu0
  %v844 = vadd.f32 0.0, %v843
  %845 = vmatmul.f32.gmra.mxu0 %v130
  %v846 = vpop.f32.mrf.mxu0
  %v847 = vadd.f32 0.0, %v846
  %848 = vmatmul.f32.gmra.mxu0 %v133
  %v849 = vpop.f32.mrf.mxu0
  %v850 = vadd.f32 0.0, %v849
  %851 = vmatmul.f32.gmra.mxu0 %v136
  %v852 = vpop.f32.mrf.mxu0
  %v853 = vadd.f32 0.0, %v852
  %854 = vmatmul.f32.gmra.mxu0 %v139
  %v855 = vpop.f32.mrf.mxu0
  %v856 = vadd.f32 0.0, %v855
  %857 = vmatmul.f32.gmra.mxu0 %v142
  %v858 = vpop.f32.mrf.mxu0
  %v859 = vadd.f32 0.0, %v858
  %860 = vmatmul.f32.gmra.mxu0 %v145
  %v861 = vpop.f32.mrf.mxu0
  %v862 = vadd.f32 0.0, %v861
  %863 = vmatmul.f32.gmra.mxu0 %v148
  %v864 = vpop.f32.mrf.mxu0
  %v865 = vadd.f32 0.0, %v864
  %866 = vmatmul.f32.gmra.mxu0 %v151
  %v867 = vpop.f32.mrf.mxu0
  %v868 = vadd.f32 0.0, %v867
  %869 = vmatmul.f32.gmra.mxu0 %v154
  %v870 = vpop.f32.mrf.mxu0
  %v871 = vadd.f32 0.0, %v870
  %872 = vmatmul.f32.gmra.mxu0 %v538
  %v873 = vpop.f32.mrf.mxu0
  %v874 = vadd.f32 0.0, %v873
  %875 = vmatmul.f32.gmra.mxu0 %v782
  %v876 = vpop.f32.mrf.mxu0
  %v877 = vadd.f32 0.0, %v876
  %878 = vdwg.mxu0
  %879 = vmatpush.msra.mxu0 0.0
  %880 = vmatpush.msra.mxu0 0.0
  %881 = vmatpush.msra.mxu0 0.0
  %882 = vmatpush.msra.mxu0 0.0
  %883 = vmatpush.msra.mxu0 0.0
  %884 = vmatpush.msra.mxu0 0.0
  %885 = vmatpush.msra.mxu0 0.0
  %886 = vmatpush.msra.mxu0 0.0
  %887 = vmatpush.msra.mxu0 0.0
  %888 = vmatpush.msra.mxu0 0.0
  %889 = vmatpush.msra.mxu0 0.0
  %890 = vmatpush.msra.mxu0 0.0
  %891 = vmatpush.msra.mxu0 %v788
  %892 = vmatpush.msra.mxu0 %v778
  %893 = vmatpush.msra.mxu0 %v776
  %894 = vmatpush.msra.mxu0 %v774
  %895 = vmatmul.f32.gmra.mxu0 %v91
  %v896 = vpop.f32.mrf.mxu0
  %v897 = vadd.f32 0.0, %v896
  %898 = vmatmul.f32.gmra.mxu0 %v94
  %v899 = vpop.f32.mrf.mxu0
  %v900 = vadd.f32 0.0, %v899
  %901 = vmatmul.f32.gmra.mxu0 %v97
  %v902 = vpop.f32.mrf.mxu0
  %v903 = vadd.f32 0.0, %v902
  %904 = vmatmul.f32.gmra.mxu0 %v100
  %v905 = vpop.f32.mrf.mxu0
  %v906 = vadd.f32 0.0, %v905
  %907 = vmatmul.f32.gmra.mxu0 %v103
  %v908 = vpop.f32.mrf.mxu0
  %v909 = vadd.f32 0.0, %v908
  %910 = vmatmul.f32.gmra.mxu0 %v106
  %v911 = vpop.f32.mrf.mxu0
  %v912 = vadd.f32 0.0, %v911
  %913 = vmatmul.f32.gmra.mxu0 %v109
  %v914 = vpop.f32.mrf.mxu0
  %v915 = vadd.f32 0.0, %v914
  %916 = vmatmul.f32.gmra.mxu0 %v112
  %v917 = vpop.f32.mrf.mxu0
  %v918 = vadd.f32 0.0, %v917
  %919 = vmatmul.f32.gmra.mxu0 %v115
  %v920 = vpop.f32.mrf.mxu0
  %v921 = vadd.f32 0.0, %v920
  %922 = vmatmul.f32.gmra.mxu0 %v118
  %v923 = vpop.f32.mrf.mxu0
  %v924 = vadd.f32 0.0, %v923
  %925 = vmatmul.f32.gmra.mxu0 %v121
  %v926 = vpop.f32.mrf.mxu0
  %v927 = vadd.f32 0.0, %v926
  %928 = vmatmul.f32.gmra.mxu0 %v124
  %v929 = vpop.f32.mrf.mxu0
  %v930 = vadd.f32 0.0, %v929
  %931 = vmatmul.f32.gmra.mxu0 %v127
  %v932 = vpop.f32.mrf.mxu0
  %v933 = vadd.f32 0.0, %v932
  %934 = vmatmul.f32.gmra.mxu0 %v130
  %v935 = vpop.f32.mrf.mxu0
  %v936 = vadd.f32 0.0, %v935
  %937 = vmatmul.f32.gmra.mxu0 %v133
  %v938 = vpop.f32.mrf.mxu0
  %v939 = vadd.f32 0.0, %v938
  %940 = vmatmul.f32.gmra.mxu0 %v136
  %v941 = vpop.f32.mrf.mxu0
  %v942 = vadd.f32 0.0, %v941
  %943 = vmatmul.f32.gmra.mxu0 %v139
  %v944 = vpop.f32.mrf.mxu0
  %v945 = vadd.f32 0.0, %v944
  %946 = vmatmul.f32.gmra.mxu0 %v142
  %v947 = vpop.f32.mrf.mxu0
  %v948 = vadd.f32 0.0, %v947
  %949 = vmatmul.f32.gmra.mxu0 %v145
  %v950 = vpop.f32.mrf.mxu0
  %v951 = vadd.f32 0.0, %v950
  %952 = vmatmul.f32.gmra.mxu0 %v148
  %v953 = vpop.f32.mrf.mxu0
  %v954 = vadd.f32 0.0, %v953
  %955 = vmatmul.f32.gmra.mxu0 %v151
  %v956 = vpop.f32.mrf.mxu0
  %v957 = vadd.f32 0.0, %v956
  %958 = vmatmul.f32.gmra.mxu0 %v154
  %v959 = vpop.f32.mrf.mxu0
  %v960 = vadd.f32 0.0, %v959
  %961 = vmatmul.f32.gmra.mxu0 %v538
  %v962 = vpop.f32.mrf.mxu0
  %v963 = vadd.f32 0.0, %v962
  %964 = vmatmul.f32.gmra.mxu0 %v782
  %v965 = vpop.f32.mrf.mxu0
  %v966 = vadd.f32 0.0, %v965
  %967 = vdwg.mxu0
  %v968 = vadd.f32 %v724, %v808
  %v969 = vadd.f32 %v725, %v897
  %v970 = vadd.f32 %v726, %v811
  %v971 = vadd.f32 %v727, %v900
  %v972 = vadd.f32 %v728, %v814
  %v973 = vadd.f32 %v729, %v903
  %v974 = vadd.f32 %v730, %v817
  %v975 = vadd.f32 %v731, %v906
  %v976 = vadd.f32 %v732, %v820
  %v977 = vadd.f32 %v733, %v909
  %v978 = vadd.f32 %v734, %v823
  %v979 = vadd.f32 %v735, %v912
  %v980 = vadd.f32 %v736, %v826
  %v981 = vadd.f32 %v737, %v915
  %v982 = vadd.f32 %v738, %v829
  %v983 = vadd.f32 %v739, %v918
  %v984 = vadd.f32 %v740, %v832
  %v985 = vadd.f32 %v741, %v921
  %v986 = vadd.f32 %v742, %v835
  %v987 = vadd.f32 %v743, %v924
  %v988 = vadd.f32 %v744, %v838
  %v989 = vadd.f32 %v745, %v927
  %v990 = vadd.f32 %v746, %v841
  %v991 = vadd.f32 %v747, %v930
  %v992 = vadd.f32 %v748, %v844
  %v993 = vadd.f32 %v749, %v933
  %v994 = vadd.f32 %v750, %v847
  %v995 = vadd.f32 %v751, %v936
  %v996 = vadd.f32 %v752, %v850
  %v997 = vadd.f32 %v753, %v939
  %v998 = vadd.f32 %v754, %v853
  %v999 = vadd.f32 %v755, %v942
  %v1000 = vadd.f32 %v756, %v856
  %v1001 = vadd.f32 %v757, %v945
  %v1002 = vadd.f32 %v758, %v859
  %v1003 = vadd.f32 %v759, %v948
  %v1004 = vadd.f32 %v760, %v862
  %v1005 = vadd.f32 %v761, %v951
  %v1006 = vadd.f32 %v762, %v865
  %v1007 = vadd.f32 %v763, %v954
  %v1008 = vadd.f32 %v764, %v868
  %v1009 = vadd.f32 %v765, %v957
  %v1010 = vadd.f32 %v766, %v871
  %v1011 = vadd.f32 %v767, %v960
  %v1012 = vadd.f32 %v768, %v874
  %v1013 = vadd.f32 %v769, %v963
  %v1014 = vadd.f32 %v770, %v877
  %v1015 = vadd.f32 %v771, %v966
  %s1016 = scalar_lea.vmem %s1, 256
  %v1017 = vld [vmem:[%s1016] sm:$0xff]
  %v1018 = vld [vmem:[%s1016 + $0x8] sm:$0xff]
  %v1019 = vld [vmem:[%s1016 + $0x10] sm:$0xff]
  %v1020 = vld [vmem:[%s1016 + $0x18] sm:$0xff]
  %v1021 = vld [vmem:[%s1016 + $0x20] sm:$0xff]
  %v1022 = vld [vmem:[%s1016 + $0x28] sm:$0xff]
  %v1023 = vld [vmem:[%s1016 + $0x30] sm:$0xf]
  %v1024 = vld [vmem:[%s1016 + $0x38] sm:$0xf]
  %v1026 = vsel %vm83, %v65, 0
  %v1029 = vsel %vm156, %v1023, 0
  %v1032 = vsel %vm156, %v1024, 0
  %1034 = vmatpush.msra.mxu0 0.0
  %1035 = vmatpush.msra.mxu0 0.0
  %1036 = vmatpush.msra.mxu0 0.0
  %1037 = vmatpush.msra.mxu0 0.0
  %1038 = vmatpush.msra.mxu0 0.0
  %1039 = vmatpush.msra.mxu0 0.0
  %1040 = vmatpush.msra.mxu0 0.0
  %1041 = vmatpush.msra.mxu0 0.0
  %1042 = vmatpush.msra.mxu0 0.0
  %1043 = vmatpush.msra.mxu0 0.0
  %1044 = vmatpush.msra.mxu0 0.0
  %1045 = vmatpush.msra.mxu0 0.0
  %1046 = vmatpush.msra.mxu0 %v1029
  %1047 = vmatpush.msra.mxu0 %v1021
  %1048 = vmatpush.msra.mxu0 %v1019
  %1049 = vmatpush.msra.mxu0 %v1017
  %1050 = vmatmul.f32.gmra.mxu0 %v94
  %v1051 = vpop.f32.mrf.mxu0
  %v1052 = vadd.f32 0.0, %v1051
  %1053 = vmatmul.f32.gmra.mxu0 %v97
  %v1054 = vpop.f32.mrf.mxu0
  %v1055 = vadd.f32 0.0, %v1054
  %1056 = vmatmul.f32.gmra.mxu0 %v100
  %v1057 = vpop.f32.mrf.mxu0
  %v1058 = vadd.f32 0.0, %v1057
  %1059 = vmatmul.f32.gmra.mxu0 %v103
  %v1060 = vpop.f32.mrf.mxu0
  %v1061 = vadd.f32 0.0, %v1060
  %1062 = vmatmul.f32.gmra.mxu0 %v106
  %v1063 = vpop.f32.mrf.mxu0
  %v1064 = vadd.f32 0.0, %v1063
  %1065 = vmatmul.f32.gmra.mxu0 %v109
  %v1066 = vpop.f32.mrf.mxu0
  %v1067 = vadd.f32 0.0, %v1066
  %1068 = vmatmul.f32.gmra.mxu0 %v112
  %v1069 = vpop.f32.mrf.mxu0
  %v1070 = vadd.f32 0.0, %v1069
  %1071 = vmatmul.f32.gmra.mxu0 %v115
  %v1072 = vpop.f32.mrf.mxu0
  %v1073 = vadd.f32 0.0, %v1072
  %1074 = vmatmul.f32.gmra.mxu0 %v118
  %v1075 = vpop.f32.mrf.mxu0
  %v1076 = vadd.f32 0.0, %v1075
  %1077 = vmatmul.f32.gmra.mxu0 %v121
  %v1078 = vpop.f32.mrf.mxu0
  %v1079 = vadd.f32 0.0, %v1078
  %1080 = vmatmul.f32.gmra.mxu0 %v124
  %v1081 = vpop.f32.mrf.mxu0
  %v1082 = vadd.f32 0.0, %v1081
  %1083 = vmatmul.f32.gmra.mxu0 %v127
  %v1084 = vpop.f32.mrf.mxu0
  %v1085 = vadd.f32 0.0, %v1084
  %1086 = vmatmul.f32.gmra.mxu0 %v130
  %v1087 = vpop.f32.mrf.mxu0
  %v1088 = vadd.f32 0.0, %v1087
  %1089 = vmatmul.f32.gmra.mxu0 %v133
  %v1090 = vpop.f32.mrf.mxu0
  %v1091 = vadd.f32 0.0, %v1090
  %1092 = vmatmul.f32.gmra.mxu0 %v136
  %v1093 = vpop.f32.mrf.mxu0
  %v1094 = vadd.f32 0.0, %v1093
  %1095 = vmatmul.f32.gmra.mxu0 %v139
  %v1096 = vpop.f32.mrf.mxu0
  %v1097 = vadd.f32 0.0, %v1096
  %1098 = vmatmul.f32.gmra.mxu0 %v142
  %v1099 = vpop.f32.mrf.mxu0
  %v1100 = vadd.f32 0.0, %v1099
  %1101 = vmatmul.f32.gmra.mxu0 %v145
  %v1102 = vpop.f32.mrf.mxu0
  %v1103 = vadd.f32 0.0, %v1102
  %1104 = vmatmul.f32.gmra.mxu0 %v148
  %v1105 = vpop.f32.mrf.mxu0
  %v1106 = vadd.f32 0.0, %v1105
  %1107 = vmatmul.f32.gmra.mxu0 %v151
  %v1108 = vpop.f32.mrf.mxu0
  %v1109 = vadd.f32 0.0, %v1108
  %1110 = vmatmul.f32.gmra.mxu0 %v154
  %v1111 = vpop.f32.mrf.mxu0
  %v1112 = vadd.f32 0.0, %v1111
  %1113 = vmatmul.f32.gmra.mxu0 %v538
  %v1114 = vpop.f32.mrf.mxu0
  %v1115 = vadd.f32 0.0, %v1114
  %1116 = vmatmul.f32.gmra.mxu0 %v782
  %v1117 = vpop.f32.mrf.mxu0
  %v1118 = vadd.f32 0.0, %v1117
  %1119 = vmatmul.f32.gmra.mxu0 %v1026
  %v1120 = vpop.f32.mrf.mxu0
  %v1121 = vadd.f32 0.0, %v1120
  %1122 = vdwg.mxu0
  %1123 = vmatpush.msra.mxu0 0.0
  %1124 = vmatpush.msra.mxu0 0.0
  %1125 = vmatpush.msra.mxu0 0.0
  %1126 = vmatpush.msra.mxu0 0.0
  %1127 = vmatpush.msra.mxu0 0.0
  %1128 = vmatpush.msra.mxu0 0.0
  %1129 = vmatpush.msra.mxu0 0.0
  %1130 = vmatpush.msra.mxu0 0.0
  %1131 = vmatpush.msra.mxu0 0.0
  %1132 = vmatpush.msra.mxu0 0.0
  %1133 = vmatpush.msra.mxu0 0.0
  %1134 = vmatpush.msra.mxu0 0.0
  %1135 = vmatpush.msra.mxu0 %v1032
  %1136 = vmatpush.msra.mxu0 %v1022
  %1137 = vmatpush.msra.mxu0 %v1020
  %1138 = vmatpush.msra.mxu0 %v1018
  %1139 = vmatmul.f32.gmra.mxu0 %v94
  %v1140 = vpop.f32.mrf.mxu0
  %v1141 = vadd.f32 0.0, %v1140
  %1142 = vmatmul.f32.gmra.mxu0 %v97
  %v1143 = vpop.f32.mrf.mxu0
  %v1144 = vadd.f32 0.0, %v1143
  %1145 = vmatmul.f32.gmra.mxu0 %v100
  %v1146 = vpop.f32.mrf.mxu0
  %v1147 = vadd.f32 0.0, %v1146
  %1148 = vmatmul.f32.gmra.mxu0 %v103
  %v1149 = vpop.f32.mrf.mxu0
  %v1150 = vadd.f32 0.0, %v1149
  %1151 = vmatmul.f32.gmra.mxu0 %v106
  %v1152 = vpop.f32.mrf.mxu0
  %v1153 = vadd.f32 0.0, %v1152
  %1154 = vmatmul.f32.gmra.mxu0 %v109
  %v1155 = vpop.f32.mrf.mxu0
  %v1156 = vadd.f32 0.0, %v1155
  %1157 = vmatmul.f32.gmra.mxu0 %v112
  %v1158 = vpop.f32.mrf.mxu0
  %v1159 = vadd.f32 0.0, %v1158
  %1160 = vmatmul.f32.gmra.mxu0 %v115
  %v1161 = vpop.f32.mrf.mxu0
  %v1162 = vadd.f32 0.0, %v1161
  %1163 = vmatmul.f32.gmra.mxu0 %v118
  %v1164 = vpop.f32.mrf.mxu0
  %v1165 = vadd.f32 0.0, %v1164
  %1166 = vmatmul.f32.gmra.mxu0 %v121
  %v1167 = vpop.f32.mrf.mxu0
  %v1168 = vadd.f32 0.0, %v1167
  %1169 = vmatmul.f32.gmra.mxu0 %v124
  %v1170 = vpop.f32.mrf.mxu0
  %v1171 = vadd.f32 0.0, %v1170
  %1172 = vmatmul.f32.gmra.mxu0 %v127
  %v1173 = vpop.f32.mrf.mxu0
  %v1174 = vadd.f32 0.0, %v1173
  %1175 = vmatmul.f32.gmra.mxu0 %v130
  %v1176 = vpop.f32.mrf.mxu0
  %v1177 = vadd.f32 0.0, %v1176
  %1178 = vmatmul.f32.gmra.mxu0 %v133
  %v1179 = vpop.f32.mrf.mxu0
  %v1180 = vadd.f32 0.0, %v1179
  %1181 = vmatmul.f32.gmra.mxu0 %v136
  %v1182 = vpop.f32.mrf.mxu0
  %v1183 = vadd.f32 0.0, %v1182
  %1184 = vmatmul.f32.gmra.mxu0 %v139
  %v1185 = vpop.f32.mrf.mxu0
  %v1186 = vadd.f32 0.0, %v1185
  %1187 = vmatmul.f32.gmra.mxu0 %v142
  %v1188 = vpop.f32.mrf.mxu0
  %v1189 = vadd.f32 0.0, %v1188
  %1190 = vmatmul.f32.gmra.mxu0 %v145
  %v1191 = vpop.f32.mrf.mxu0
  %v1192 = vadd.f32 0.0, %v1191
  %1193 = vmatmul.f32.gmra.mxu0 %v148
  %v1194 = vpop.f32.mrf.mxu0
  %v1195 = vadd.f32 0.0, %v1194
  %1196 = vmatmul.f32.gmra.mxu0 %v151
  %v1197 = vpop.f32.mrf.mxu0
  %v1198 = vadd.f32 0.0, %v1197
  %1199 = vmatmul.f32.gmra.mxu0 %v154
  %v1200 = vpop.f32.mrf.mxu0
  %v1201 = vadd.f32 0.0, %v1200
  %1202 = vmatmul.f32.gmra.mxu0 %v538
  %v1203 = vpop.f32.mrf.mxu0
  %v1204 = vadd.f32 0.0, %v1203
  %1205 = vmatmul.f32.gmra.mxu0 %v782
  %v1206 = vpop.f32.mrf.mxu0
  %v1207 = vadd.f32 0.0, %v1206
  %1208 = vmatmul.f32.gmra.mxu0 %v1026
  %v1209 = vpop.f32.mrf.mxu0
  %v1210 = vadd.f32 0.0, %v1209
  %1211 = vdwg.mxu0
  %v1212 = vadd.f32 %v968, %v1052
  %v1213 = vadd.f32 %v969, %v1141
  %v1214 = vadd.f32 %v970, %v1055
  %v1215 = vadd.f32 %v971, %v1144
  %v1216 = vadd.f32 %v972, %v1058
  %v1217 = vadd.f32 %v973, %v1147
  %v1218 = vadd.f32 %v974, %v1061
  %v1219 = vadd.f32 %v975, %v1150
  %v1220 = vadd.f32 %v976, %v1064
  %v1221 = vadd.f32 %v977, %v1153
  %v1222 = vadd.f32 %v978, %v1067
  %v1223 = vadd.f32 %v979, %v1156
  %v1224 = vadd.f32 %v980, %v1070
  %v1225 = vadd.f32 %v981, %v1159
  %v1226 = vadd.f32 %v982, %v1073
  %v1227 = vadd.f32 %v983, %v1162
  %v1228 = vadd.f32 %v984, %v1076
  %v1229 = vadd.f32 %v985, %v1165
  %v1230 = vadd.f32 %v986, %v1079
  %v1231 = vadd.f32 %v987, %v1168
  %v1232 = vadd.f32 %v988, %v1082
  %v1233 = vadd.f32 %v989, %v1171
  %v1234 = vadd.f32 %v990, %v1085
  %v1235 = vadd.f32 %v991, %v1174
  %v1236 = vadd.f32 %v992, %v1088
  %v1237 = vadd.f32 %v993, %v1177
  %v1238 = vadd.f32 %v994, %v1091
  %v1239 = vadd.f32 %v995, %v1180
  %v1240 = vadd.f32 %v996, %v1094
  %v1241 = vadd.f32 %v997, %v1183
  %v1242 = vadd.f32 %v998, %v1097
  %v1243 = vadd.f32 %v999, %v1186
  %v1244 = vadd.f32 %v1000, %v1100
  %v1245 = vadd.f32 %v1001, %v1189
  %v1246 = vadd.f32 %v1002, %v1103
  %v1247 = vadd.f32 %v1003, %v1192
  %v1248 = vadd.f32 %v1004, %v1106
  %v1249 = vadd.f32 %v1005, %v1195
  %v1250 = vadd.f32 %v1006, %v1109
  %v1251 = vadd.f32 %v1007, %v1198
  %v1252 = vadd.f32 %v1008, %v1112
  %v1253 = vadd.f32 %v1009, %v1201
  %v1254 = vadd.f32 %v1010, %v1115
  %v1255 = vadd.f32 %v1011, %v1204
  %v1256 = vadd.f32 %v1012, %v1118
  %v1257 = vadd.f32 %v1013, %v1207
  %v1258 = vadd.f32 %v1014, %v1121
  %v1259 = vadd.f32 %v1015, %v1210
  %v1260 = vld [vmem:[%s2] sm:$0x3]
  %v1262 = vperm.slane %v1260, 0
  %v1263 = vperm.slane %v1260, 1
  %v1266 = vadd.f32 %v1212, %v1262
  %v1267 = vadd.f32 %v1213, %v1263
  %v1268 = vadd.f32 %v1214, %v1262
  %v1269 = vadd.f32 %v1215, %v1263
  %v1270 = vadd.f32 %v1216, %v1262
  %v1271 = vadd.f32 %v1217, %v1263
  %v1272 = vadd.f32 %v1218, %v1262
  %v1273 = vadd.f32 %v1219, %v1263
  %v1274 = vadd.f32 %v1220, %v1262
  %v1275 = vadd.f32 %v1221, %v1263
  %v1276 = vadd.f32 %v1222, %v1262
  %v1277 = vadd.f32 %v1223, %v1263
  %v1278 = vadd.f32 %v1224, %v1262
  %v1279 = vadd.f32 %v1225, %v1263
  %v1280 = vadd.f32 %v1226, %v1262
  %v1281 = vadd.f32 %v1227, %v1263
  %v1282 = vadd.f32 %v1228, %v1262
  %v1283 = vadd.f32 %v1229, %v1263
  %v1284 = vadd.f32 %v1230, %v1262
  %v1285 = vadd.f32 %v1231, %v1263
  %v1286 = vadd.f32 %v1232, %v1262
  %v1287 = vadd.f32 %v1233, %v1263
  %v1288 = vadd.f32 %v1234, %v1262
  %v1289 = vadd.f32 %v1235, %v1263
  %v1290 = vadd.f32 %v1236, %v1262
  %v1291 = vadd.f32 %v1237, %v1263
  %v1292 = vadd.f32 %v1238, %v1262
  %v1293 = vadd.f32 %v1239, %v1263
  %v1294 = vadd.f32 %v1240, %v1262
  %v1295 = vadd.f32 %v1241, %v1263
  %v1296 = vadd.f32 %v1242, %v1262
  %v1297 = vadd.f32 %v1243, %v1263
  %v1298 = vadd.f32 %v1244, %v1262
  %v1299 = vadd.f32 %v1245, %v1263
  %v1300 = vadd.f32 %v1246, %v1262
  %v1301 = vadd.f32 %v1247, %v1263
  %v1302 = vadd.f32 %v1248, %v1262
  %v1303 = vadd.f32 %v1249, %v1263
  %v1304 = vadd.f32 %v1250, %v1262
  %v1305 = vadd.f32 %v1251, %v1263
  %v1306 = vadd.f32 %v1252, %v1262
  %v1307 = vadd.f32 %v1253, %v1263
  %v1308 = vadd.f32 %v1254, %v1262
  %v1309 = vadd.f32 %v1255, %v1263
  %v1310 = vadd.f32 %v1256, %v1262
  %v1311 = vadd.f32 %v1257, %v1263
  %v1312 = vadd.f32 %v1258, %v1262
  %v1313 = vadd.f32 %v1259, %v1263
  %v1314 = vmax.f32 %v1266, 0.0
  %v1315 = vmax.f32 %v1267, 0.0
  %v1316 = vmax.f32 %v1268, 0.0
  %v1317 = vmax.f32 %v1269, 0.0
  %v1318 = vmax.f32 %v1270, 0.0
  %v1319 = vmax.f32 %v1271, 0.0
  %v1320 = vmax.f32 %v1272, 0.0
  %v1321 = vmax.f32 %v1273, 0.0
  %v1322 = vmax.f32 %v1274, 0.0
  %v1323 = vmax.f32 %v1275, 0.0
  %v1324 = vmax.f32 %v1276, 0.0
  %v1325 = vmax.f32 %v1277, 0.0
  %v1326 = vmax.f32 %v1278, 0.0
  %v1327 = vmax.f32 %v1279, 0.0
  %v1328 = vmax.f32 %v1280, 0.0
  %v1329 = vmax.f32 %v1281, 0.0
  %v1330 = vmax.f32 %v1282, 0.0
  %v1331 = vmax.f32 %v1283, 0.0
  %v1332 = vmax.f32 %v1284, 0.0
  %v1333 = vmax.f32 %v1285, 0.0
  %v1334 = vmax.f32 %v1286, 0.0
  %v1335 = vmax.f32 %v1287, 0.0
  %v1336 = vmax.f32 %v1288, 0.0
  %v1337 = vmax.f32 %v1289, 0.0
  %v1338 = vmax.f32 %v1290, 0.0
  %v1339 = vmax.f32 %v1291, 0.0
  %v1340 = vmax.f32 %v1292, 0.0
  %v1341 = vmax.f32 %v1293, 0.0
  %v1342 = vmax.f32 %v1294, 0.0
  %v1343 = vmax.f32 %v1295, 0.0
  %v1344 = vmax.f32 %v1296, 0.0
  %v1345 = vmax.f32 %v1297, 0.0
  %v1346 = vmax.f32 %v1298, 0.0
  %v1347 = vmax.f32 %v1299, 0.0
  %v1348 = vmax.f32 %v1300, 0.0
  %v1349 = vmax.f32 %v1301, 0.0
  %v1350 = vmax.f32 %v1302, 0.0
  %v1351 = vmax.f32 %v1303, 0.0
  %v1352 = vmax.f32 %v1304, 0.0
  %v1353 = vmax.f32 %v1305, 0.0
  %v1354 = vmax.f32 %v1306, 0.0
  %v1355 = vmax.f32 %v1307, 0.0
  %v1356 = vmax.f32 %v1308, 0.0
  %v1357 = vmax.f32 %v1309, 0.0
  %v1358 = vmax.f32 %v1310, 0.0
  %v1359 = vmax.f32 %v1311, 0.0
  %v1360 = vmax.f32 %v1312, 0.0
  %v1361 = vmax.f32 %v1313, 0.0
  %1410 = vrot.lane.b32.xlu0 %v1314, 122
  %v1411 = vpop.permute.xlu0 %1410
  %1412 = vrot.lane.b32.xlu0 %v1315, 122
  %v1413 = vpop.permute.xlu0 %1412
  %1414 = vrot.lane.b32.xlu0 %v1316, 122
  %v1415 = vpop.permute.xlu0 %1414
  %1416 = vrot.lane.b32.xlu0 %v1317, 122
  %v1417 = vpop.permute.xlu0 %1416
  %1418 = vrot.lane.b32.xlu0 %v1318, 122
  %v1419 = vpop.permute.xlu0 %1418
  %1420 = vrot.lane.b32.xlu0 %v1319, 122
  %v1421 = vpop.permute.xlu0 %1420
  %1422 = vrot.lane.b32.xlu0 %v1320, 122
  %v1423 = vpop.permute.xlu0 %1422
  %1424 = vrot.lane.b32.xlu0 %v1321, 122
  %v1425 = vpop.permute.xlu0 %1424
  %1426 = vrot.lane.b32.xlu0 %v1322, 122
  %v1427 = vpop.permute.xlu0 %1426
  %1428 = vrot.lane.b32.xlu0 %v1323, 122
  %v1429 = vpop.permute.xlu0 %1428
  %1430 = vrot.lane.b32.xlu0 %v1324, 122
  %v1431 = vpop.permute.xlu0 %1430
  %1432 = vrot.lane.b32.xlu0 %v1325, 122
  %v1433 = vpop.permute.xlu0 %1432
  %1434 = vrot.lane.b32.xlu0 %v1326, 122
  %v1435 = vpop.permute.xlu0 %1434
  %1436 = vrot.lane.b32.xlu0 %v1327, 122
  %v1437 = vpop.permute.xlu0 %1436
  %1438 = vrot.lane.b32.xlu0 %v1328, 122
  %v1439 = vpop.permute.xlu0 %1438
  %1440 = vrot.lane.b32.xlu0 %v1329, 122
  %v1441 = vpop.permute.xlu0 %1440
  %1442 = vrot.lane.b32.xlu0 %v1330, 122
  %v1443 = vpop.permute.xlu0 %1442
  %1444 = vrot.lane.b32.xlu0 %v1331, 122
  %v1445 = vpop.permute.xlu0 %1444
  %1446 = vrot.lane.b32.xlu0 %v1332, 122
  %v1447 = vpop.permute.xlu0 %1446
  %1448 = vrot.lane.b32.xlu0 %v1333, 122
  %v1449 = vpop.permute.xlu0 %1448
  %1450 = vrot.lane.b32.xlu0 %v1334, 122
  %v1451 = vpop.permute.xlu0 %1450
  %1452 = vrot.lane.b32.xlu0 %v1335, 122
  %v1453 = vpop.permute.xlu0 %1452
  %1454 = vrot.lane.b32.xlu0 %v1336, 122
  %v1455 = vpop.permute.xlu0 %1454
  %1456 = vrot.lane.b32.xlu0 %v1337, 122
  %v1457 = vpop.permute.xlu0 %1456
  %1458 = vrot.lane.b32.xlu0 %v1338, 122
  %v1459 = vpop.permute.xlu0 %1458
  %1460 = vrot.lane.b32.xlu0 %v1339, 122
  %v1461 = vpop.permute.xlu0 %1460
  %1462 = vrot.lane.b32.xlu0 %v1340, 122
  %v1463 = vpop.permute.xlu0 %1462
  %1464 = vrot.lane.b32.xlu0 %v1341, 122
  %v1465 = vpop.permute.xlu0 %1464
  %1466 = vrot.lane.b32.xlu0 %v1342, 122
  %v1467 = vpop.permute.xlu0 %1466
  %1468 = vrot.lane.b32.xlu0 %v1343, 122
  %v1469 = vpop.permute.xlu0 %1468
  %1470 = vrot.lane.b32.xlu0 %v1344, 122
  %v1471 = vpop.permute.xlu0 %1470
  %1472 = vrot.lane.b32.xlu0 %v1345, 122
  %v1473 = vpop.permute.xlu0 %1472
  %1474 = vrot.lane.b32.xlu0 %v1346, 122
  %v1475 = vpop.permute.xlu0 %1474
  %1476 = vrot.lane.b32.xlu0 %v1347, 122
  %v1477 = vpop.permute.xlu0 %1476
  %1478 = vrot.lane.b32.xlu0 %v1348, 122
  %v1479 = vpop.permute.xlu0 %1478
  %1480 = vrot.lane.b32.xlu0 %v1349, 122
  %v1481 = vpop.permute.xlu0 %1480
  %1482 = vrot.lane.b32.xlu0 %v1350, 122
  %v1483 = vpop.permute.xlu0 %1482
  %1484 = vrot.lane.b32.xlu0 %v1351, 122
  %v1485 = vpop.permute.xlu0 %1484
  %1486 = vrot.lane.b32.xlu0 %v1352, 122
  %v1487 = vpop.permute.xlu0 %1486
  %1488 = vrot.lane.b32.xlu0 %v1353, 122
  %v1489 = vpop.permute.xlu0 %1488
  %1490 = vrot.lane.b32.xlu0 %v1354, 122
  %v1491 = vpop.permute.xlu0 %1490
  %1492 = vrot.lane.b32.xlu0 %v1355, 122
  %v1493 = vpop.permute.xlu0 %1492
  %1494 = vrot.lane.b32.xlu0 %v1356, 122
  %v1495 = vpop.permute.xlu0 %1494
  %1496 = vrot.lane.b32.xlu0 %v1357, 122
  %v1497 = vpop.permute.xlu0 %1496
  %1498 = vrot.lane.b32.xlu0 %v1358, 122
  %v1499 = vpop.permute.xlu0 %1498
  %1500 = vrot.lane.b32.xlu0 %v1359, 122
  %v1501 = vpop.permute.xlu0 %1500
  %1502 = vrot.lane.b32.xlu0 %v1360, 122
  %v1503 = vpop.permute.xlu0 %1502
  %1504 = vrot.lane.b32.xlu0 %v1361, 122
  %v1505 = vpop.permute.xlu0 %1504
  %vm1506 = vcmask 998400
  %v1507 = vsel %vm1506, %v1411, %v1413
  %v1508 = vsel %vm1506, %v1415, %v1417
  %v1509 = vsel %vm1506, %v1419, %v1421
  %v1510 = vsel %vm1506, %v1423, %v1425
  %v1511 = vsel %vm1506, %v1427, %v1429
  %v1512 = vsel %vm1506, %v1431, %v1433
  %v1513 = vsel %vm1506, %v1435, %v1437
  %v1514 = vsel %vm1506, %v1439, %v1441
  %v1515 = vsel %vm1506, %v1443, %v1445
  %v1516 = vsel %vm1506, %v1447, %v1449
  %v1517 = vsel %vm1506, %v1451, %v1453
  %v1518 = vsel %vm1506, %v1455, %v1457
  %v1519 = vsel %vm1506, %v1459, %v1461
  %v1520 = vsel %vm1506, %v1463, %v1465
  %v1521 = vsel %vm1506, %v1467, %v1469
  %v1522 = vsel %vm1506, %v1471, %v1473
  %v1523 = vsel %vm1506, %v1475, %v1477
  %v1524 = vsel %vm1506, %v1479, %v1481
  %v1525 = vsel %vm1506, %v1483, %v1485
  %v1526 = vsel %vm1506, %v1487, %v1489
  %v1527 = vsel %vm1506, %v1491, %v1493
  %v1528 = vsel %vm1506, %v1495, %v1497
  %v1529 = vsel %vm1506, %v1499, %v1501
  %v1530 = vsel %vm1506, %v1503, %v1505
  %v1579 = vmax.f32 %v1314, %v1507
  %v1580 = vmax.f32 %v1315, %v1413
  %v1581 = vmax.f32 %v1316, %v1508
  %v1582 = vmax.f32 %v1317, %v1417
  %v1583 = vmax.f32 %v1318, %v1509
  %v1584 = vmax.f32 %v1319, %v1421
  %v1585 = vmax.f32 %v1320, %v1510
  %v1586 = vmax.f32 %v1321, %v1425
  %v1587 = vmax.f32 %v1322, %v1511
  %v1588 = vmax.f32 %v1323, %v1429
  %v1589 = vmax.f32 %v1324, %v1512
  %v1590 = vmax.f32 %v1325, %v1433
  %v1591 = vmax.f32 %v1326, %v1513
  %v1592 = vmax.f32 %v1327, %v1437
  %v1593 = vmax.f32 %v1328, %v1514
  %v1594 = vmax.f32 %v1329, %v1441
  %v1595 = vmax.f32 %v1330, %v1515
  %v1596 = vmax.f32 %v1331, %v1445
  %v1597 = vmax.f32 %v1332, %v1516
  %v1598 = vmax.f32 %v1333, %v1449
  %v1599 = vmax.f32 %v1334, %v1517
  %v1600 = vmax.f32 %v1335, %v1453
  %v1601 = vmax.f32 %v1336, %v1518
  %v1602 = vmax.f32 %v1337, %v1457
  %v1603 = vmax.f32 %v1338, %v1519
  %v1604 = vmax.f32 %v1339, %v1461
  %v1605 = vmax.f32 %v1340, %v1520
  %v1606 = vmax.f32 %v1341, %v1465
  %v1607 = vmax.f32 %v1342, %v1521
  %v1608 = vmax.f32 %v1343, %v1469
  %v1609 = vmax.f32 %v1344, %v1522
  %v1610 = vmax.f32 %v1345, %v1473
  %v1611 = vmax.f32 %v1346, %v1523
  %v1612 = vmax.f32 %v1347, %v1477
  %v1613 = vmax.f32 %v1348, %v1524
  %v1614 = vmax.f32 %v1349, %v1481
  %v1615 = vmax.f32 %v1350, %v1525
  %v1616 = vmax.f32 %v1351, %v1485
  %v1617 = vmax.f32 %v1352, %v1526
  %v1618 = vmax.f32 %v1353, %v1489
  %v1619 = vmax.f32 %v1354, %v1527
  %v1620 = vmax.f32 %v1355, %v1493
  %v1621 = vmax.f32 %v1356, %v1528
  %v1622 = vmax.f32 %v1357, %v1497
  %v1623 = vmax.f32 %v1358, %v1529
  %v1624 = vmax.f32 %v1359, %v1501
  %v1625 = vmax.f32 %v1360, %v1530
  %v1626 = vmax.f32 %v1361, %v1505
  %v1627 = vmax.f32 %v1579, %v1581
  %v1628 = vmax.f32 %v1580, %v1582
  %v1629 = vmax.f32 %v1583, %v1585
  %v1630 = vmax.f32 %v1584, %v1586
  %v1631 = vmax.f32 %v1587, %v1589
  %v1632 = vmax.f32 %v1588, %v1590
  %v1633 = vmax.f32 %v1591, %v1593
  %v1634 = vmax.f32 %v1592, %v1594
  %v1635 = vmax.f32 %v1595, %v1597
  %v1636 = vmax.f32 %v1596, %v1598
  %v1637 = vmax.f32 %v1599, %v1601
  %v1638 = vmax.f32 %v1600, %v1602
  %v1639 = vmax.f32 %v1603, %v1605
  %v1640 = vmax.f32 %v1604, %v1606
  %v1641 = vmax.f32 %v1607, %v1609
  %v1642 = vmax.f32 %v1608, %v1610
  %v1643 = vmax.f32 %v1611, %v1613
  %v1644 = vmax.f32 %v1612, %v1614
  %v1645 = vmax.f32 %v1615, %v1617
  %v1646 = vmax.f32 %v1616, %v1618
  %v1647 = vmax.f32 %v1619, %v1621
  %v1648 = vmax.f32 %v1620, %v1622
  %v1649 = vmax.f32 %v1623, %v1625
  %v1650 = vmax.f32 %v1624, %v1626
  %v1651 = vld [vmem:[%s3] sm:$0xff]
  %v1652 = vld [vmem:[%s3 + $0x8] sm:$0xff]
  %v1653 = vld [vmem:[%s3 + $0x10] sm:$0xff]
  %v1654 = vld [vmem:[%s3 + $0x18] sm:$0xff]
  %v1655 = vld [vmem:[%s3 + $0x20] sm:$0xff]
  %v1656 = vld [vmem:[%s3 + $0x28] sm:$0xff]
  %v1657 = vld [vmem:[%s3 + $0x30] sm:$0xff]
  %v1658 = vld [vmem:[%s3 + $0x38] sm:$0xff]
  %v1659 = vld [vmem:[%s3 + $0x40] sm:$0xff]
  %v1660 = vld [vmem:[%s3 + $0x48] sm:$0xff]
  %v1661 = vld [vmem:[%s3 + $0x50] sm:$0xff]
  %v1662 = vld [vmem:[%s3 + $0x58] sm:$0xff]
  %v1663 = vld [vmem:[%s3 + $0x60] sm:$0xff]
  %v1664 = vld [vmem:[%s3 + $0x68] sm:$0xff]
  %v1665 = vld [vmem:[%s3 + $0x70] sm:$0xff]
  %v1666 = vld [vmem:[%s3 + $0x78] sm:$0xff]
  %v1667 = vld [vmem:[%s3 + $0x80] sm:$0xff]
  %v1668 = vld [vmem:[%s3 + $0x88] sm:$0x3]
  %s1669 = scalar_lea.vmem %s3, 144
  %v1670 = vld [vmem:[%s1669] sm:$0xff]
  %v1671 = vld [vmem:[%s1669 + $0x8] sm:$0xff]
  %v1672 = vld [vmem:[%s1669 + $0x10] sm:$0xff]
  %v1673 = vld [vmem:[%s1669 + $0x18] sm:$0xff]
  %v1674 = vld [vmem:[%s1669 + $0x20] sm:$0xff]
  %v1675 = vld [vmem:[%s1669 + $0x28] sm:$0xff]
  %v1676 = vld [vmem:[%s1669 + $0x30] sm:$0xff]
  %v1677 = vld [vmem:[%s1669 + $0x38] sm:$0xff]
  %v1678 = vld [vmem:[%s1669 + $0x40] sm:$0xff]
  %v1679 = vld [vmem:[%s1669 + $0x48] sm:$0xff]
  %v1680 = vld [vmem:[%s1669 + $0x50] sm:$0xff]
  %v1681 = vld [vmem:[%s1669 + $0x58] sm:$0xff]
  %v1682 = vld [vmem:[%s1669 + $0x60] sm:$0xff]
  %v1683 = vld [vmem:[%s1669 + $0x68] sm:$0xff]
  %v1684 = vld [vmem:[%s1669 + $0x70] sm:$0xff]
  %v1685 = vld [vmem:[%s1669 + $0x78] sm:$0xff]
  %v1686 = vld [vmem:[%s1669 + $0x80] sm:$0xff]
  %v1687 = vld [vmem:[%s1669 + $0x88] sm:$0x3]
  %vm1688 = vcmask 80896
  %v1690 = vsel %vm1688, %v1630, 0
  %v1693 = vsel %vm1688, %v1632, 0
  %v1696 = vsel %vm1688, %v1634, 0
  %v1699 = vsel %vm1688, %v1636, 0
  %v1702 = vsel %vm1688, %v1638, 0
  %v1705 = vsel %vm1688, %v1640, 0
  %v1708 = vsel %vm1688, %v1642, 0
  %v1711 = vsel %vm1688, %v1644, 0
  %vm1713 = vcmask 1041408
  %v1715 = vsel %vm1713, %v1687, 0
  %1717 = vmatpush.msra.mxu0 %v1685
  %1718 = vmatpush.msra.mxu0 %v1684
  %1719 = vmatpush.msra.mxu0 %v1683
  %1720 = vmatpush.msra.mxu0 %v1682
  %1721 = vmatpush.msra.mxu0 %v1681
  %1722 = vmatpush.msra.mxu0 %v1680
  %1723 = vmatpush.msra.mxu0 %v1679
  %1724 = vmatpush.msra.mxu0 %v1678
  %1725 = vmatpush.msra.mxu0 %v1677
  %1726 = vmatpush.msra.mxu0 %v1676
  %1727 = vmatpush.msra.mxu0 %v1675
  %1728 = vmatpush.msra.mxu0 %v1674
  %1729 = vmatpush.msra.mxu0 %v1673
  %1730 = vmatpush.msra.mxu0 %v1672
  %1731 = vmatpush.msra.mxu0 %v1671
  %1732 = vmatpush.msra.mxu0 %v1670
  %1733 = vmatmul.f32.gmra.mxu0 %v1629
  %v1734 = vpop.f32.mrf.mxu0
  %v1735 = vadd.f32 0.0, %v1734
  %1736 = vmatmul.f32.gmra.mxu0 %v1631
  %v1737 = vpop.f32.mrf.mxu0
  %v1738 = vadd.f32 0.0, %v1737
  %1739 = vmatmul.f32.gmra.mxu0 %v1633
  %v1740 = vpop.f32.mrf.mxu0
  %v1741 = vadd.f32 0.0, %v1740
  %1742 = vmatmul.f32.gmra.mxu0 %v1635
  %v1743 = vpop.f32.mrf.mxu0
  %v1744 = vadd.f32 0.0, %v1743
  %1745 = vmatmul.f32.gmra.mxu0 %v1637
  %v1746 = vpop.f32.mrf.mxu0
  %v1747 = vadd.f32 0.0, %v1746
  %1748 = vmatmul.f32.gmra.mxu0 %v1639
  %v1749 = vpop.f32.mrf.mxu0
  %v1750 = vadd.f32 0.0, %v1749
  %1751 = vmatmul.f32.gmra.mxu0 %v1641
  %v1752 = vpop.f32.mrf.mxu0
  %v1753 = vadd.f32 0.0, %v1752
  %1754 = vmatmul.f32.gmra.mxu0 %v1643
  %v1755 = vpop.f32.mrf.mxu0
  %v1756 = vadd.f32 0.0, %v1755
  %1757 = vdwg.mxu0
  %1758 = vmatpush.msra.mxu0 0.0
  %1759 = vmatpush.msra.mxu0 0.0
  %1760 = vmatpush.msra.mxu0 0.0
  %1761 = vmatpush.msra.mxu0 0.0
  %1762 = vmatpush.msra.mxu0 0.0
  %1763 = vmatpush.msra.mxu0 0.0
  %1764 = vmatpush.msra.mxu0 0.0
  %1765 = vmatpush.msra.mxu0 0.0
  %1766 = vmatpush.msra.mxu0 0.0
  %1767 = vmatpush.msra.mxu0 0.0
  %1768 = vmatpush.msra.mxu0 0.0
  %1769 = vmatpush.msra.mxu0 0.0
  %1770 = vmatpush.msra.mxu0 0.0
  %1771 = vmatpush.msra.mxu0 0.0
  %1772 = vmatpush.msra.mxu0 %v1715
  %1773 = vmatpush.msra.mxu0 %v1686
  %1774 = vmatmul.f32.gmra.mxu0 %v1690
  %v1775 = vpop.f32.mrf.mxu0
  %v1776 = vadd.f32 %v1735, %v1775
  %1777 = vmatmul.f32.gmra.mxu0 %v1693
  %v1778 = vpop.f32.mrf.mxu0
  %v1779 = vadd.f32 %v1738, %v1778
  %1780 = vmatmul.f32.gmra.mxu0 %v1696
  %v1781 = vpop.f32.mrf.mxu0
  %v1782 = vadd.f32 %v1741, %v1781
  %1783 = vmatmul.f32.gmra.mxu0 %v1699
  %v1784 = vpop.f32.mrf.mxu0
  %v1785 = vadd.f32 %v1744, %v1784
  %1786 = vmatmul.f32.gmra.mxu0 %v1702
  %v1787 = vpop.f32.mrf.mxu0
  %v1788 = vadd.f32 %v1747, %v1787
  %1789 = vmatmul.f32.gmra.mxu0 %v1705
  %v1790 = vpop.f32.mrf.mxu0
  %v1791 = vadd.f32 %v1750, %v1790
  %1792 = vmatmul.f32.gmra.mxu0 %v1708
  %v1793 = vpop.f32.mrf.mxu0
  %v1794 = vadd.f32 %v1753, %v1793
  %1795 = vmatmul.f32.gmra.mxu0 %v1711
  %v1796 = vpop.f32.mrf.mxu0
  %v1797 = vadd.f32 %v1756, %v1796
  %1798 = vdwg.mxu0
  %v1800 = vsel %vm1688, %v1628, 0
  %v1803 = vsel %vm1713, %v1668, 0
  %1805 = vmatpush.msra.mxu0 %v1666
  %1806 = vmatpush.msra.mxu0 %v1665
  %1807 = vmatpush.msra.mxu0 %v1664
  %1808 = vmatpush.msra.mxu0 %v1663
  %1809 = vmatpush.msra.mxu0 %v1662
  %1810 = vmatpush.msra.mxu0 %v1661
  %1811 = vmatpush.msra.mxu0 %v1660
  %1812 = vmatpush.msra.mxu0 %v1659
  %1813 = vmatpush.msra.mxu0 %v1658
  %1814 = vmatpush.msra.mxu0 %v1657
  %1815 = vmatpush.msra.mxu0 %v1656
  %1816 = vmatpush.msra.mxu0 %v1655
  %1817 = vmatpush.msra.mxu0 %v1654
  %1818 = vmatpush.msra.mxu0 %v1653
  %1819 = vmatpush.msra.mxu0 %v1652
  %1820 = vmatpush.msra.mxu0 %v1651
  %1821 = vmatmul.f32.gmra.mxu0 %v1627
  %v1822 = vpop.f32.mrf.mxu0
  %v1823 = vadd.f32 %v1776, %v1822
  %1824 = vmatmul.f32.gmra.mxu0 %v1629
  %v1825 = vpop.f32.mrf.mxu0
  %v1826 = vadd.f32 %v1779, %v1825
  %1827 = vmatmul.f32.gmra.mxu0 %v1631
  %v1828 = vpop.f32.mrf.mxu0
  %v1829 = vadd.f32 %v1782, %v1828
  %1830 = vmatmul.f32.gmra.mxu0 %v1633
  %v1831 = vpop.f32.mrf.mxu0
  %v1832 = vadd.f32 %v1785, %v1831
  %1833 = vmatmul.f32.gmra.mxu0 %v1635
  %v1834 = vpop.f32.mrf.mxu0
  %v1835 = vadd.f32 %v1788, %v1834
  %1836 = vmatmul.f32.gmra.mxu0 %v1637
  %v1837 = vpop.f32.mrf.mxu0
  %v1838 = vadd.f32 %v1791, %v1837
  %1839 = vmatmul.f32.gmra.mxu0 %v1639
  %v1840 = vpop.f32.mrf.mxu0
  %v1841 = vadd.f32 %v1794, %v1840
  %1842 = vmatmul.f32.gmra.mxu0 %v1641
  %v1843 = vpop.f32.mrf.mxu0
  %v1844 = vadd.f32 %v1797, %v1843
  %1845 = vdwg.mxu0
  %1846 = vmatpush.msra.mxu0 0.0
  %1847 = vmatpush.msra.mxu0 0.0
  %1848 = vmatpush.msra.mxu0 0.0
  %1849 = vmatpush.msra.mxu0 0.0
  %1850 = vmatpush.msra.mxu0 0.0
  %1851 = vmatpush.msra.mxu0 0.0
  %1852 = vmatpush.msra.mxu0 0.0
  %1853 = vmatpush.msra.mxu0 0.0
  %1854 = vmatpush.msra.mxu0 0.0
  %1855 = vmatpush.msra.mxu0 0.0
  %1856 = vmatpush.msra.mxu0 0.0
  %1857 = vmatpush.msra.mxu0 0.0
  %1858 = vmatpush.msra.mxu0 0.0
  %1859 = vmatpush.msra.mxu0 0.0
  %1860 = vmatpush.msra.mxu0 %v1803
  %1861 = vmatpush.msra.mxu0 %v1667
  %1862 = vmatmul.f32.gmra.mxu0 %v1800
  %v1863 = vpop.f32.mrf.mxu0
  %v1864 = vadd.f32 %v1823, %v1863
  %1865 = vmatmul.f32.gmra.mxu0 %v1690
  %v1866 = vpop.f32.mrf.mxu0
  %v1867 = vadd.f32 %v1826, %v1866
  %1868 = vmatmul.f32.gmra.mxu0 %v1693
  %v1869 = vpop.f32.mrf.mxu0
  %v1870 = vadd.f32 %v1829, %v1869
  %1871 = vmatmul.f32.gmra.mxu0 %v1696
  %v1872 = vpop.f32.mrf.mxu0
  %v1873 = vadd.f32 %v1832, %v1872
  %1874 = vmatmul.f32.gmra.mxu0 %v1699
  %v1875 = vpop.f32.mrf.mxu0
  %v1876 = vadd.f32 %v1835, %v1875
  %1877 = vmatmul.f32.gmra.mxu0 %v1702
  %v1878 = vpop.f32.mrf.mxu0
  %v1879 = vadd.f32 %v1838, %v1878
  %1880 = vmatmul.f32.gmra.mxu0 %v1705
  %v1881 = vpop.f32.mrf.mxu0
  %v1882 = vadd.f32 %v1841, %v1881
  %1883 = vmatmul.f32.gmra.mxu0 %v1708
  %v1884 = vpop.f32.mrf.mxu0
  %v1885 = vadd.f32 %v1844, %v1884
  %1886 = vdwg.mxu0
  %s1887 = scalar_lea.vmem %s3, 288
  %v1888 = vld [vmem:[%s1887] sm:$0xff]
  %v1889 = vld [vmem:[%s1887 + $0x8] sm:$0xff]
  %v1890 = vld [vmem:[%s1887 + $0x10] sm:$0xff]
  %v1891 = vld [vmem:[%s1887 + $0x18] sm:$0xff]
  %v1892 = vld [vmem:[%s1887 + $0x20] sm:$0xff]
  %v1893 = vld [vmem:[%s1887 + $0x28] sm:$0xff]
  %v1894 = vld [vmem:[%s1887 + $0x30] sm:$0xff]
  %v1895 = vld [vmem:[%s1887 + $0x38] sm:$0xff]
  %v1896 = vld [vmem:[%s1887 + $0x40] sm:$0xff]
  %v1897 = vld [vmem:[%s1887 + $0x48] sm:$0xff]
  %v1898 = vld [vmem:[%s1887 + $0x50] sm:$0xff]
  %v1899 = vld [vmem:[%s1887 + $0x58] sm:$0xff]
  %v1900 = vld [vmem:[%s1887 + $0x60] sm:$0xff]
  %v1901 = vld [vmem:[%s1887 + $0x68] sm:$0xff]
  %v1902 = vld [vmem:[%s1887 + $0x70] sm:$0xff]
  %v1903 = vld [vmem:[%s1887 + $0x78] sm:$0xff]
  %v1904 = vld [vmem:[%s1887 + $0x80] sm:$0xff]
  %v1905 = vld [vmem:[%s1887 + $0x88] sm:$0x3]
  %v1907 = vsel %vm1688, %v1646, 0
  %v1910 = vsel %vm1713, %v1905, 0
  %1912 = vmatpush.msra.mxu0 %v1903
  %1913 = vmatpush.msra.mxu0 %v1902
  %1914 = vmatpush.msra.mxu0 %v1901
  %1915 = vmatpush.msra.mxu0 %v1900
  %1916 = vmatpush.msra.mxu0 %v1899
  %1917 = vmatpush.msra.mxu0 %v1898
  %1918 = vmatpush.msra.mxu0 %v1897
  %1919 = vmatpush.msra.mxu0 %v1896
  %1920 = vmatpush.msra.mxu0 %v1895
  %1921 = vmatpush.msra.mxu0 %v1894
  %1922 = vmatpush.msra.mxu0 %v1893
  %1923 = vmatpush.msra.mxu0 %v1892
  %1924 = vmatpush.msra.mxu0 %v1891
  %1925 = vmatpush.msra.mxu0 %v1890
  %1926 = vmatpush.msra.mxu0 %v1889
  %1927 = vmatpush.msra.mxu0 %v1888
  %1928 = vmatmul.f32.gmra.mxu0 %v1631
  %v1929 = vpop.f32.mrf.mxu0
  %v1930 = vadd.f32 0.0, %v1929
  %1931 = vmatmul.f32.gmra.mxu0 %v1633
  %v1932 = vpop.f32.mrf.mxu0
  %v1933 = vadd.f32 0.0, %v1932
  %1934 = vmatmul.f32.gmra.mxu0 %v1635
  %v1935 = vpop.f32.mrf.mxu0
  %v1936 = vadd.f32 0.0, %v1935
  %1937 = vmatmul.f32.gmra.mxu0 %v1637
  %v1938 = vpop.f32.mrf.mxu0
  %v1939 = vadd.f32 0.0, %v1938
  %1940 = vmatmul.f32.gmra.mxu0 %v1639
  %v1941 = vpop.f32.mrf.mxu0
  %v1942 = vadd.f32 0.0, %v1941
  %1943 = vmatmul.f32.gmra.mxu0 %v1641
  %v1944 = vpop.f32.mrf.mxu0
  %v1945 = vadd.f32 0.0, %v1944
  %1946 = vmatmul.f32.gmra.mxu0 %v1643
  %v1947 = vpop.f32.mrf.mxu0
  %v1948 = vadd.f32 0.0, %v1947
  %1949 = vmatmul.f32.gmra.mxu0 %v1645
  %v1950 = vpop.f32.mrf.mxu0
  %v1951 = vadd.f32 0.0, %v1950
  %1952 = vdwg.mxu0
  %1953 = vmatpush.msra.mxu0 0.0
  %1954 = vmatpush.msra.mxu0 0.0
  %1955 = vmatpush.msra.mxu0 0.0
  %1956 = vmatpush.msra.mxu0 0.0
  %1957 = vmatpush.msra.mxu0 0.0
  %1958 = vmatpush.msra.mxu0 0.0
  %1959 = vmatpush.msra.mxu0 0.0
  %1960 = vmatpush.msra.mxu0 0.0
  %1961 = vmatpush.msra.mxu0 0.0
  %1962 = vmatpush.msra.mxu0 0.0
  %1963 = vmatpush.msra.mxu0 0.0
  %1964 = vmatpush.msra.mxu0 0.0
  %1965 = vmatpush.msra.mxu0 0.0
  %1966 = vmatpush.msra.mxu0 0.0
  %1967 = vmatpush.msra.mxu0 %v1910
  %1968 = vmatpush.msra.mxu0 %v1904
  %1969 = vmatmul.f32.gmra.mxu0 %v1693
  %v1970 = vpop.f32.mrf.mxu0
  %v1971 = vadd.f32 %v1930, %v1970
  %1972 = vmatmul.f32.gmra.mxu0 %v1696
  %v1973 = vpop.f32.mrf.mxu0
  %v1974 = vadd.f32 %v1933, %v1973
  %1975 = vmatmul.f32.gmra.mxu0 %v1699
  %v1976 = vpop.f32.mrf.mxu0
  %v1977 = vadd.f32 %v1936, %v1976
  %1978 = vmatmul.f32.gmra.mxu0 %v1702
  %v1979 = vpop.f32.mrf.mxu0
  %v1980 = vadd.f32 %v1939, %v1979
  %1981 = vmatmul.f32.gmra.mxu0 %v1705
  %v1982 = vpop.f32.mrf.mxu0
  %v1983 = vadd.f32 %v1942, %v1982
  %1984 = vmatmul.f32.gmra.mxu0 %v1708
  %v1985 = vpop.f32.mrf.mxu0
  %v1986 = vadd.f32 %v1945, %v1985
  %1987 = vmatmul.f32.gmra.mxu0 %v1711
  %v1988 = vpop.f32.mrf.mxu0
  %v1989 = vadd.f32 %v1948, %v1988
  %1990 = vmatmul.f32.gmra.mxu0 %v1907
  %v1991 = vpop.f32.mrf.mxu0
  %v1992 = vadd.f32 %v1951, %v1991
  %1993 = vdwg.mxu0
  %v1994 = vadd.f32 %v1864, %v1971
  %v1995 = vadd.f32 %v1867, %v1974
  %v1996 = vadd.f32 %v1870, %v1977
  %v1997 = vadd.f32 %v1873, %v1980
  %v1998 = vadd.f32 %v1876, %v1983
  %v1999 = vadd.f32 %v1879, %v1986
  %v2000 = vadd.f32 %v1882, %v1989
  %v2001 = vadd.f32 %v1885, %v1992
  %s2002 = scalar_lea.vmem %s3, 432
  %v2003 = vld [vmem:[%s2002] sm:$0xff]
  %v2004 = vld [vmem:[%s2002 + $0x8] sm:$0xff]
  %v2005 = vld [vmem:[%s2002 + $0x10] sm:$0xff]
  %v2006 = vld [vmem:[%s2002 + $0x18] sm:$0xff]
  %v2007 = vld [vmem:[%s2002 + $0x20] sm:$0xff]
  %v2008 = vld [vmem:[%s2002 + $0x28] sm:$0xff]
  %v2009 = vld [vmem:[%s2002 + $0x30] sm:$0xff]
  %v2010 = vld [vmem:[%s2002 + $0x38] sm:$0xff]
  %v2011 = vld [vmem:[%s2002 + $0x40] sm:$0xff]
  %v2012 = vld [vmem:[%s2002 + $0x48] sm:$0xff]
  %v2013 = vld [vmem:[%s2002 + $0x50] sm:$0xff]
  %v2014 = vld [vmem:[%s2002 + $0x58] sm:$0xff]
  %v2015 = vld [vmem:[%s2002 + $0x60] sm:$0xff]
  %v2016 = vld [vmem:[%s2002 + $0x68] sm:$0xff]
  %v2017 = vld [vmem:[%s2002 + $0x70] sm:$0xff]
  %v2018 = vld [vmem:[%s2002 + $0x78] sm:$0xff]
  %v2019 = vld [vmem:[%s2002 + $0x80] sm:$0xff]
  %v2020 = vld [vmem:[%s2002 + $0x88] sm:$0x3]
  %v2022 = vsel %vm1688, %v1648, 0
  %v2025 = vsel %vm1713, %v2020, 0
  %2027 = vmatpush.msra.mxu0 %v2018
  %2028 = vmatpush.msra.mxu0 %v2017
  %2029 = vmatpush.msra.mxu0 %v2016
  %2030 = vmatpush.msra.mxu0 %v2015
  %2031 = vmatpush.msra.mxu0 %v2014
  %2032 = vmatpush.msra.mxu0 %v2013
  %2033 = vmatpush.msra.mxu0 %v2012
  %2034 = vmatpush.msra.mxu0 %v2011
  %2035 = vmatpush.msra.mxu0 %v2010
  %2036 = vmatpush.msra.mxu0 %v2009
  %2037 = vmatpush.msra.mxu0 %v2008
  %2038 = vmatpush.msra.mxu0 %v2007
  %2039 = vmatpush.msra.mxu0 %v2006
  %2040 = vmatpush.msra.mxu0 %v2005
  %2041 = vmatpush.msra.mxu0 %v2004
  %2042 = vmatpush.msra.mxu0 %v2003
  %2043 = vmatmul.f32.gmra.mxu0 %v1633
  %v2044 = vpop.f32.mrf.mxu0
  %v2045 = vadd.f32 0.0, %v2044
  %2046 = vmatmul.f32.gmra.mxu0 %v1635
  %v2047 = vpop.f32.mrf.mxu0
  %v2048 = vadd.f32 0.0, %v2047
  %2049 = vmatmul.f32.gmra.mxu0 %v1637
  %v2050 = vpop.f32.mrf.mxu0
  %v2051 = vadd.f32 0.0, %v2050
  %2052 = vmatmul.f32.gmra.mxu0 %v1639
  %v2053 = vpop.f32.mrf.mxu0
  %v2054 = vadd.f32 0.0, %v2053
  %2055 = vmatmul.f32.gmra.mxu0 %v1641
  %v2056 = vpop.f32.mrf.mxu0
  %v2057 = vadd.f32 0.0, %v2056
  %2058 = vmatmul.f32.gmra.mxu0 %v1643
  %v2059 = vpop.f32.mrf.mxu0
  %v2060 = vadd.f32 0.0, %v2059
  %2061 = vmatmul.f32.gmra.mxu0 %v1645
  %v2062 = vpop.f32.mrf.mxu0
  %v2063 = vadd.f32 0.0, %v2062
  %2064 = vmatmul.f32.gmra.mxu0 %v1647
  %v2065 = vpop.f32.mrf.mxu0
  %v2066 = vadd.f32 0.0, %v2065
  %2067 = vdwg.mxu0
  %2068 = vmatpush.msra.mxu0 0.0
  %2069 = vmatpush.msra.mxu0 0.0
  %2070 = vmatpush.msra.mxu0 0.0
  %2071 = vmatpush.msra.mxu0 0.0
  %2072 = vmatpush.msra.mxu0 0.0
  %2073 = vmatpush.msra.mxu0 0.0
  %2074 = vmatpush.msra.mxu0 0.0
  %2075 = vmatpush.msra.mxu0 0.0
  %2076 = vmatpush.msra.mxu0 0.0
  %2077 = vmatpush.msra.mxu0 0.0
  %2078 = vmatpush.msra.mxu0 0.0
  %2079 = vmatpush.msra.mxu0 0.0
  %2080 = vmatpush.msra.mxu0 0.0
  %2081 = vmatpush.msra.mxu0 0.0
  %2082 = vmatpush.msra.mxu0 %v2025
  %2083 = vmatpush.msra.mxu0 %v2019
  %2084 = vmatmul.f32.gmra.mxu0 %v1696
  %v2085 = vpop.f32.mrf.mxu0
  %v2086 = vadd.f32 %v2045, %v2085
  %2087 = vmatmul.f32.gmra.mxu0 %v1699
  %v2088 = vpop.f32.mrf.mxu0
  %v2089 = vadd.f32 %v2048, %v2088
  %2090 = vmatmul.f32.gmra.mxu0 %v1702
  %v2091 = vpop.f32.mrf.mxu0
  %v2092 = vadd.f32 %v2051, %v2091
  %2093 = vmatmul.f32.gmra.mxu0 %v1705
  %v2094 = vpop.f32.mrf.mxu0
  %v2095 = vadd.f32 %v2054, %v2094
  %2096 = vmatmul.f32.gmra.mxu0 %v1708
  %v2097 = vpop.f32.mrf.mxu0
  %v2098 = vadd.f32 %v2057, %v2097
  %2099 = vmatmul.f32.gmra.mxu0 %v1711
  %v2100 = vpop.f32.mrf.mxu0
  %v2101 = vadd.f32 %v2060, %v2100
  %2102 = vmatmul.f32.gmra.mxu0 %v1907
  %v2103 = vpop.f32.mrf.mxu0
  %v2104 = vadd.f32 %v2063, %v2103
  %2105 = vmatmul.f32.gmra.mxu0 %v2022
  %v2106 = vpop.f32.mrf.mxu0
  %v2107 = vadd.f32 %v2066, %v2106
  %2108 = vdwg.mxu0
  %v2109 = vadd.f32 %v1994, %v2086
  %v2110 = vadd.f32 %v1995, %v2089
  %v2111 = vadd.f32 %v1996, %v2092
  %v2112 = vadd.f32 %v1997, %v2095
  %v2113 = vadd.f32 %v1998, %v2098
  %v2114 = vadd.f32 %v1999, %v2101
  %v2115 = vadd.f32 %v2000, %v2104
  %v2116 = vadd.f32 %v2001, %v2107
  %s2117 = scalar_lea.vmem %s3, 576
  %v2118 = vld [vmem:[%s2117] sm:$0xff]
  %v2119 = vld [vmem:[%s2117 + $0x8] sm:$0xff]
  %v2120 = vld [vmem:[%s2117 + $0x10] sm:$0xff]
  %v2121 = vld [vmem:[%s2117 + $0x18] sm:$0xff]
  %v2122 = vld [vmem:[%s2117 + $0x20] sm:$0xff]
  %v2123 = vld [vmem:[%s2117 + $0x28] sm:$0xff]
  %v2124 = vld [vmem:[%s2117 + $0x30] sm:$0xff]
  %v2125 = vld [vmem:[%s2117 + $0x38] sm:$0xff]
  %v2126 = vld [vmem:[%s2117 + $0x40] sm:$0xff]
  %v2127 = vld [vmem:[%s2117 + $0x48] sm:$0xff]
  %v2128 = vld [vmem:[%s2117 + $0x50] sm:$0xff]
  %v2129 = vld [vmem:[%s2117 + $0x58] sm:$0xff]
  %v2130 = vld [vmem:[%s2117 + $0x60] sm:$0xff]
  %v2131 = vld [vmem:[%s2117 + $0x68] sm:$0xff]
  %v2132 = vld [vmem:[%s2117 + $0x70] sm:$0xff]
  %v2133 = vld [vmem:[%s2117 + $0x78] sm:$0xff]
  %v2134 = vld [vmem:[%s2117 + $0x80] sm:$0xff]
  %v2135 = vld [vmem:[%s2117 + $0x88] sm:$0x3]
  %v2137 = vsel %vm1688, %v1650, 0
  %v2140 = vsel %vm1713, %v2135, 0
  %2142 = vmatpush.msra.mxu0 %v2133
  %2143 = vmatpush.msra.mxu0 %v2132
  %2144 = vmatpush.msra.mxu0 %v2131
  %2145 = vmatpush.msra.mxu0 %v2130
  %2146 = vmatpush.msra.mxu0 %v2129
  %2147 = vmatpush.msra.mxu0 %v2128
  %2148 = vmatpush.msra.mxu0 %v2127
  %2149 = vmatpush.msra.mxu0 %v2126
  %2150 = vmatpush.msra.mxu0 %v2125
  %2151 = vmatpush.msra.mxu0 %v2124
  %2152 = vmatpush.msra.mxu0 %v2123
  %2153 = vmatpush.msra.mxu0 %v2122
  %2154 = vmatpush.msra.mxu0 %v2121
  %2155 = vmatpush.msra.mxu0 %v2120
  %2156 = vmatpush.msra.mxu0 %v2119
  %2157 = vmatpush.msra.mxu0 %v2118
  %2158 = vmatmul.f32.gmra.mxu0 %v1635
  %v2159 = vpop.f32.mrf.mxu0
  %v2160 = vadd.f32 0.0, %v2159
  %2161 = vmatmul.f32.gmra.mxu0 %v1637
  %v2162 = vpop.f32.mrf.mxu0
  %v2163 = vadd.f32 0.0, %v2162
  %2164 = vmatmul.f32.gmra.mxu0 %v1639
  %v2165 = vpop.f32.mrf.mxu0
  %v2166 = vadd.f32 0.0, %v2165
  %2167 = vmatmul.f32.gmra.mxu0 %v1641
  %v2168 = vpop.f32.mrf.mxu0
  %v2169 = vadd.f32 0.0, %v2168
  %2170 = vmatmul.f32.gmra.mxu0 %v1643
  %v2171 = vpop.f32.mrf.mxu0
  %v2172 = vadd.f32 0.0, %v2171
  %2173 = vmatmul.f32.gmra.mxu0 %v1645
  %v2174 = vpop.f32.mrf.mxu0
  %v2175 = vadd.f32 0.0, %v2174
  %2176 = vmatmul.f32.gmra.mxu0 %v1647
  %v2177 = vpop.f32.mrf.mxu0
  %v2178 = vadd.f32 0.0, %v2177
  %2179 = vmatmul.f32.gmra.mxu0 %v1649
  %v2180 = vpop.f32.mrf.mxu0
  %v2181 = vadd.f32 0.0, %v2180
  %2182 = vdwg.mxu0
  %2183 = vmatpush.msra.mxu0 0.0
  %2184 = vmatpush.msra.mxu0 0.0
  %2185 = vmatpush.msra.mxu0 0.0
  %2186 = vmatpush.msra.mxu0 0.0
  %2187 = vmatpush.msra.mxu0 0.0
  %2188 = vmatpush.msra.mxu0 0.0
  %2189 = vmatpush.msra.mxu0 0.0
  %2190 = vmatpush.msra.mxu0 0.0
  %2191 = vmatpush.msra.mxu0 0.0
  %2192 = vmatpush.msra.mxu0 0.0
  %2193 = vmatpush.msra.mxu0 0.0
  %2194 = vmatpush.msra.mxu0 0.0
  %2195 = vmatpush.msra.mxu0 0.0
  %2196 = vmatpush.msra.mxu0 0.0
  %2197 = vmatpush.msra.mxu0 %v2140
  %2198 = vmatpush.msra.mxu0 %v2134
  %2199 = vmatmul.f32.gmra.mxu0 %v1699
  %v2200 = vpop.f32.mrf.mxu0
  %v2201 = vadd.f32 %v2160, %v2200
  %2202 = vmatmul.f32.gmra.mxu0 %v1702
  %v2203 = vpop.f32.mrf.mxu0
  %v2204 = vadd.f32 %v2163, %v2203
  %2205 = vmatmul.f32.gmra.mxu0 %v1705
  %v2206 = vpop.f32.mrf.mxu0
  %v2207 = vadd.f32 %v2166, %v2206
  %2208 = vmatmul.f32.gmra.mxu0 %v1708
  %v2209 = vpop.f32.mrf.mxu0
  %v2210 = vadd.f32 %v2169, %v2209
  %2211 = vmatmul.f32.gmra.mxu0 %v1711
  %v2212 = vpop.f32.mrf.mxu0
  %v2213 = vadd.f32 %v2172, %v2212
  %2214 = vmatmul.f32.gmra.mxu0 %v1907
  %v2215 = vpop.f32.mrf.mxu0
  %v2216 = vadd.f32 %v2175, %v2215
  %2217 = vmatmul.f32.gmra.mxu0 %v2022
  %v2218 = vpop.f32.mrf.mxu0
  %v2219 = vadd.f32 %v2178, %v2218
  %2220 = vmatmul.f32.gmra.mxu0 %v2137
  %v2221 = vpop.f32.mrf.mxu0
  %v2222 = vadd.f32 %v2181, %v2221
  %2223 = vdwg.mxu0
  %v2224 = vadd.f32 %v2109, %v2201
  %v2225 = vadd.f32 %v2110, %v2204
  %v2226 = vadd.f32 %v2111, %v2207
  %v2227 = vadd.f32 %v2112, %v2210
  %v2228 = vadd.f32 %v2113, %v2213
  %v2229 = vadd.f32 %v2114, %v2216
  %v2230 = vadd.f32 %v2115, %v2219
  %v2231 = vadd.f32 %v2116, %v2222
  %v2232 = vld [vmem:[%s4] sm:$0x1]
  %v2234 = vperm.slane %v2232, 0
  %v2236 = vadd.f32 %v2224, %v2234
  %v2237 = vadd.f32 %v2225, %v2234
  %v2238 = vadd.f32 %v2226, %v2234
  %v2239 = vadd.f32 %v2227, %v2234
  %v2240 = vadd.f32 %v2228, %v2234
  %v2241 = vadd.f32 %v2229, %v2234
  %v2242 = vadd.f32 %v2230, %v2234
  %v2243 = vadd.f32 %v2231, %v2234
  %v2244 = vmax.f32 %v2236, 0.0
  %v2245 = vmax.f32 %v2237, 0.0
  %v2246 = vmax.f32 %v2238, 0.0
  %v2247 = vmax.f32 %v2239, 0.0
  %v2248 = vmax.f32 %v2240, 0.0
  %v2249 = vmax.f32 %v2241, 0.0
  %v2250 = vmax.f32 %v2242, 0.0
  %v2251 = vmax.f32 %v2243, 0.0
  %2260 = vrot.lane.b32.xlu0 %v2244, 112
  %v2261 = vpop.permute.xlu0 %2260
  %2262 = vrot.lane.b32.xlu0 %v2245, 112
  %v2263 = vpop.permute.xlu0 %2262
  %2264 = vrot.lane.b32.xlu0 %v2246, 112
  %v2265 = vpop.permute.xlu0 %2264
  %2266 = vrot.lane.b32.xlu0 %v2247, 112
  %v2267 = vpop.permute.xlu0 %2266
  %2268 = vrot.lane.b32.xlu0 %v2248, 112
  %v2269 = vpop.permute.xlu0 %2268
  %2270 = vrot.lane.b32.xlu0 %v2249, 112
  %v2271 = vpop.permute.xlu0 %2270
  %2272 = vrot.lane.b32.xlu0 %v2250, 112
  %v2273 = vpop.permute.xlu0 %2272
  %2274 = vrot.lane.b32.xlu0 %v2251, 112
  %v2275 = vpop.permute.xlu0 %2274
  %v2284 = vmax.f32 %v2244, %v2261
  %v2285 = vmax.f32 %v2245, %v2263
  %v2286 = vmax.f32 %v2246, %v2265
  %v2287 = vmax.f32 %v2247, %v2267
  %v2288 = vmax.f32 %v2248, %v2269
  %v2289 = vmax.f32 %v2249, %v2271
  %v2290 = vmax.f32 %v2250, %v2273
  %v2291 = vmax.f32 %v2251, %v2275
  %v2292 = vmax.f32 %v2284, %v2285
  %v2293 = vmax.f32 %v2286, %v2287
  %v2294 = vmax.f32 %v2288, %v2289
  %v2295 = vmax.f32 %v2290, %v2291
  %v2296 = vld [vmem:[%s5] sm:$0xff]
  %v2297 = vld [vmem:[%s5 + $0x8] sm:$0xff]
  %v2298 = vld [vmem:[%s5 + $0x10] sm:$0xff]
  %v2299 = vld [vmem:[%s5 + $0x18] sm:$0xff]
  %v2300 = vld [vmem:[%s5 + $0x20] sm:$0xff]
  %v2301 = vld [vmem:[%s5 + $0x28] sm:$0xff]
  %v2302 = vld [vmem:[%s5 + $0x30] sm:$0xff]
  %v2303 = vld [vmem:[%s5 + $0x38] sm:$0xff]
  %v2304 = vld [vmem:[%s5 + $0x40] sm:$0xff]
  %v2305 = vld [vmem:[%s5 + $0x48] sm:$0xff]
  %v2306 = vld [vmem:[%s5 + $0x50] sm:$0xff]
  %v2307 = vld [vmem:[%s5 + $0x58] sm:$0xff]
  %v2308 = vld [vmem:[%s5 + $0x60] sm:$0xff]
  %v2309 = vld [vmem:[%s5 + $0x68] sm:$0xff]
  %s2310 = scalar_lea.vmem %s5, 112
  %v2311 = vld [vmem:[%s2310] sm:$0xff]
  %v2312 = vld [vmem:[%s2310 + $0x8] sm:$0xff]
  %v2313 = vld [vmem:[%s2310 + $0x10] sm:$0xff]
  %v2314 = vld [vmem:[%s2310 + $0x18] sm:$0xff]
  %v2315 = vld [vmem:[%s2310 + $0x20] sm:$0xff]
  %v2316 = vld [vmem:[%s2310 + $0x28] sm:$0xff]
  %v2317 = vld [vmem:[%s2310 + $0x30] sm:$0xff]
  %v2318 = vld [vmem:[%s2310 + $0x38] sm:$0xff]
  %v2319 = vld [vmem:[%s2310 + $0x40] sm:$0xff]
  %v2320 = vld [vmem:[%s2310 + $0x48] sm:$0xff]
  %v2321 = vld [vmem:[%s2310 + $0x50] sm:$0xff]
  %v2322 = vld [vmem:[%s2310 + $0x58] sm:$0xff]
  %v2323 = vld [vmem:[%s2310 + $0x60] sm:$0xff]
  %v2324 = vld [vmem:[%s2310 + $0x68] sm:$0xff]
  %vm2325 = vcmask 916480
  %v2327 = vsel %vm2325, %v2293, 0
  %2329 = vmatpush.msra.mxu0 0.0
  %2330 = vmatpush.msra.mxu0 0.0
  %2331 = vmatpush.msra.mxu0 %v2324
  %2332 = vmatpush.msra.mxu0 %v2323
  %2333 = vmatpush.msra.mxu0 %v2322
  %2334 = vmatpush.msra.mxu0 %v2321
  %2335 = vmatpush.msra.mxu0 %v2320
  %2336 = vmatpush.msra.mxu0 %v2319
  %2337 = vmatpush.msra.mxu0 %v2318
  %2338 = vmatpush.msra.mxu0 %v2317
  %2339 = vmatpush.msra.mxu0 %v2316
  %2340 = vmatpush.msra.mxu0 %v2315
  %2341 = vmatpush.msra.mxu0 %v2314
  %2342 = vmatpush.msra.mxu0 %v2313
  %2343 = vmatpush.msra.mxu0 %v2312
  %2344 = vmatpush.msra.mxu0 %v2311
  %2345 = vmatmul.f32.gmra.mxu0 %v2327
  %v2346 = vpop.f32.mrf.mxu0
  %v2347 = vadd.f32 0.0, %v2346
  %2348 = vdwg.mxu0
  %v2350 = vsel %vm2325, %v2292, 0
  %2352 = vmatpush.msra.mxu0 0.0
  %2353 = vmatpush.msra.mxu0 0.0
  %2354 = vmatpush.msra.mxu0 %v2309
  %2355 = vmatpush.msra.mxu0 %v2308
  %2356 = vmatpush.msra.mxu0 %v2307
  %2357 = vmatpush.msra.mxu0 %v2306
  %2358 = vmatpush.msra.mxu0 %v2305
  %2359 = vmatpush.msra.mxu0 %v2304
  %2360 = vmatpush.msra.mxu0 %v2303
  %2361 = vmatpush.msra.mxu0 %v2302
  %2362 = vmatpush.msra.mxu0 %v2301
  %2363 = vmatpush.msra.mxu0 %v2300
  %2364 = vmatpush.msra.mxu0 %v2299
  %2365 = vmatpush.msra.mxu0 %v2298
  %2366 = vmatpush.msra.mxu0 %v2297
  %2367 = vmatpush.msra.mxu0 %v2296
  %2368 = vmatmul.f32.gmra.mxu0 %v2350
  %v2369 = vpop.f32.mrf.mxu0
  %v2370 = vadd.f32 %v2347, %v2369
  %2371 = vdwg.mxu0
  %s2372 = scalar_lea.vmem %s5, 224
  %v2373 = vld [vmem:[%s2372] sm:$0xff]
  %v2374 = vld [vmem:[%s2372 + $0x8] sm:$0xff]
  %v2375 = vld [vmem:[%s2372 + $0x10] sm:$0xff]
  %v2376 = vld [vmem:[%s2372 + $0x18] sm:$0xff]
  %v2377 = vld [vmem:[%s2372 + $0x20] sm:$0xff]
  %v2378 = vld [vmem:[%s2372 + $0x28] sm:$0xff]
  %v2379 = vld [vmem:[%s2372 + $0x30] sm:$0xff]
  %v2380 = vld [vmem:[%s2372 + $0x38] sm:$0xff]
  %v2381 = vld [vmem:[%s2372 + $0x40] sm:$0xff]
  %v2382 = vld [vmem:[%s2372 + $0x48] sm:$0xff]
  %v2383 = vld [vmem:[%s2372 + $0x50] sm:$0xff]
  %v2384 = vld [vmem:[%s2372 + $0x58] sm:$0xff]
  %v2385 = vld [vmem:[%s2372 + $0x60] sm:$0xff]
  %v2386 = vld [vmem:[%s2372 + $0x68] sm:$0xff]
  %v2388 = vsel %vm2325, %v2294, 0
  %2390 = vmatpush.msra.mxu0 0.0
  %2391 = vmatpush.msra.mxu0 0.0
  %2392 = vmatpush.msra.mxu0 %v2386
  %2393 = vmatpush.msra.mxu0 %v2385
  %2394 = vmatpush.msra.mxu0 %v2384
  %2395 = vmatpush.msra.mxu0 %v2383
  %2396 = vmatpush.msra.mxu0 %v2382
  %2397 = vmatpush.msra.mxu0 %v2381
  %2398 = vmatpush.msra.mxu0 %v2380
  %2399 = vmatpush.msra.mxu0 %v2379
  %2400 = vmatpush.msra.mxu0 %v2378
  %2401 = vmatpush.msra.mxu0 %v2377
  %2402 = vmatpush.msra.mxu0 %v2376
  %2403 = vmatpush.msra.mxu0 %v2375
  %2404 = vmatpush.msra.mxu0 %v2374
  %2405 = vmatpush.msra.mxu0 %v2373
  %2406 = vmatmul.f32.gmra.mxu0 %v2388
  %v2407 = vpop.f32.mrf.mxu0
  %v2408 = vadd.f32 0.0, %v2407
  %2409 = vdwg.mxu0
  %v2410 = vadd.f32 %v2370, %v2408
  %s2411 = scalar_lea.vmem %s5, 336
  %v2412 = vld [vmem:[%s2411] sm:$0xff]
  %v2413 = vld [vmem:[%s2411 + $0x8] sm:$0xff]
  %v2414 = vld [vmem:[%s2411 + $0x10] sm:$0xff]
  %v2415 = vld [vmem:[%s2411 + $0x18] sm:$0xff]
  %v2416 = vld [vmem:[%s2411 + $0x20] sm:$0xff]
  %v2417 = vld [vmem:[%s2411 + $0x28] sm:$0xff]
  %v2418 = vld [vmem:[%s2411 + $0x30] sm:$0xff]
  %v2419 = vld [vmem:[%s2411 + $0x38] sm:$0xff]
  %v2420 = vld [vmem:[%s2411 + $0x40] sm:$0xff]
  %v2421 = vld [vmem:[%s2411 + $0x48] sm:$0xff]
  %v2422 = vld [vmem:[%s2411 + $0x50] sm:$0xff]
  %v2423 = vld [vmem:[%s2411 + $0x58] sm:$0xff]
  %v2424 = vld [vmem:[%s2411 + $0x60] sm:$0xff]
  %v2425 = vld [vmem:[%s2411 + $0x68] sm:$0xff]
  %v2427 = vsel %vm2325, %v2295, 0
  %2429 = vmatpush.msra.mxu0 0.0
  %2430 = vmatpush.msra.mxu0 0.0
  %2431 = vmatpush.msra.mxu0 %v2425
  %2432 = vmatpush.msra.mxu0 %v2424
  %2433 = vmatpush.msra.mxu0 %v2423
  %2434 = vmatpush.msra.mxu0 %v2422
  %2435 = vmatpush.msra.mxu0 %v2421
  %2436 = vmatpush.msra.mxu0 %v2420
  %2437 = vmatpush.msra.mxu0 %v2419
  %2438 = vmatpush.msra.mxu0 %v2418
  %2439 = vmatpush.msra.mxu0 %v2417
  %2440 = vmatpush.msra.mxu0 %v2416
  %2441 = vmatpush.msra.mxu0 %v2415
  %2442 = vmatpush.msra.mxu0 %v2414
  %2443 = vmatpush.msra.mxu0 %v2413
  %2444 = vmatpush.msra.mxu0 %v2412
  %2445 = vmatmul.f32.gmra.mxu0 %v2427
  %v2446 = vpop.f32.mrf.mxu0
  %v2447 = vadd.f32 0.0, %v2446
  %2448 = vdwg.mxu0
  %v2449 = vadd.f32 %v2410, %v2447
  %v2450 = vld [vmem:[%s6] sm:$0x1]
  %v2452 = vperm.slane %v2450, 0
  %v2454 = vadd.f32 %v2449, %v2452
  %v2455 = vmax.f32 %v2454, 0.0
  %v2456 = vld [vmem:[%s7] sm:$0xff]
  %v2457 = vld [vmem:[%s7 + $0x8] sm:$0xff]
  %v2458 = vld [vmem:[%s7 + $0x10] sm:$0xff]
  %v2459 = vld [vmem:[%s7 + $0x18] sm:$0xff]
  %v2460 = vld [vmem:[%s7 + $0x20] sm:$0xff]
  %v2461 = vld [vmem:[%s7 + $0x28] sm:$0xff]
  %v2462 = vld [vmem:[%s7 + $0x30] sm:$0xff]
  %v2463 = vld [vmem:[%s7 + $0x38] sm:$0xff]
  %v2464 = vld [vmem:[%s7 + $0x40] sm:$0xff]
  %v2465 = vld [vmem:[%s7 + $0x48] sm:$0xff]
  %v2466 = vld [vmem:[%s7 + $0x50] sm:$0xff]
  %v2467 = vld [vmem:[%s7 + $0x58] sm:$0xff]
  %v2468 = vld [vmem:[%s7 + $0x60] sm:$0xff]
  %v2469 = vld [vmem:[%s7 + $0x68] sm:$0xff]
  %v2470 = vld [vmem:[%s7 + $0x70] sm:$0xff]
  %v2471 = vld [vmem:[%s8] sm:$0x1]
  %v2473 = vperm.slane %v2471, 0
  %vm2475 = vcmask 982016
  %v2477 = vsel %vm2475, %v2455, 0
  %2479 = vmatpush.msra.mxu0 0.0
  %2480 = vmatpush.msra.mxu0 %v2470
  %2481 = vmatpush.msra.mxu0 %v2469
  %2482 = vmatpush.msra.mxu0 %v2468
  %2483 = vmatpush.msra.mxu0 %v2467
  %2484 = vmatpush.msra.mxu0 %v2466
  %2485 = vmatpush.msra.mxu0 %v2465
  %2486 = vmatpush.msra.mxu0 %v2464
  %2487 = vmatpush.msra.mxu0 %v2463
  %2488 = vmatpush.msra.mxu0 %v2462
  %2489 = vmatpush.msra.mxu0 %v2461
  %2490 = vmatpush.msra.mxu0 %v2460
  %2491 = vmatpush.msra.mxu0 %v2459
  %2492 = vmatpush.msra.mxu0 %v2458
  %2493 = vmatpush.msra.mxu0 %v2457
  %2494 = vmatpush.msra.mxu0 %v2456
  %2495 = vmatmul.f32.gmra.mxu0 %v2477
  %v2496 = vpop.f32.mrf.mxu0
  %v2497 = vadd.f32 %v2473, %v2496
  %2498 = vdwg.mxu0
  %v2499 = vmax.f32 %v2497, 0.0
  %v2500 = vld [vmem:[%s9] sm:$0xff]
  %v2501 = vld [vmem:[%s9 + $0x8] sm:$0xff]
  %v2502 = vld [vmem:[%s9 + $0x10] sm:$0xff]
  %v2503 = vld [vmem:[%s9 + $0x18] sm:$0xff]
  %v2504 = vld [vmem:[%s9 + $0x20] sm:$0xff]
  %v2505 = vld [vmem:[%s9 + $0x28] sm:$0xff]
  %v2506 = vld [vmem:[%s9 + $0x30] sm:$0xff]
  %v2507 = vld [vmem:[%s9 + $0x38] sm:$0xff]
  %v2508 = vld [vmem:[%s9 + $0x40] sm:$0xff]
  %v2509 = vld [vmem:[%s9 + $0x48] sm:$0xff]
  %v2510 = vld [vmem:[%s9 + $0x50] sm:$0xf]
  %v2511 = vld [vmem:[%s10] sm:$0x1]
  %v2513 = vperm.slane %v2511, 0
  %vm2515 = vcmask 687104
  %v2517 = vsel %vm2515, %v2499, 0
  %v2520 = vsel %vm156, %v2510, 0
  %2522 = vmatpush.msra.mxu0 0.0
  %2523 = vmatpush.msra.mxu0 0.0
  %2524 = vmatpush.msra.mxu0 0.0
  %2525 = vmatpush.msra.mxu0 0.0
  %2526 = vmatpush.msra.mxu0 0.0
  %2527 = vmatpush.msra.mxu0 %v2520
  %2528 = vmatpush.msra.mxu0 %v2509
  %2529 = vmatpush.msra.mxu0 %v2508
  %2530 = vmatpush.msra.mxu0 %v2507
  %2531 = vmatpush.msra.mxu0 %v2506
  %2532 = vmatpush.msra.mxu0 %v2505
  %2533 = vmatpush.msra.mxu0 %v2504
  %2534 = vmatpush.msra.mxu0 %v2503
  %2535 = vmatpush.msra.mxu0 %v2502
  %2536 = vmatpush.msra.mxu0 %v2501
  %2537 = vmatpush.msra.mxu0 %v2500
  %2538 = vmatmul.f32.gmra.mxu0 %v2517
  %v2539 = vpop.f32.mrf.mxu0
  %v2540 = vadd.f32 %v2513, %v2539
  %2541 = vdwg.mxu0
  %v2542 = vsel %vm1688, %v2540, -inf
  %2543 = vmax.xlane.f32.xlu0 %v2542
  %v2544 = vpop.xlane.xlu0 %2543
  %v2545 = vsub.f32 %v2540, %v2544
  %v2546 = vmul.f32 %v2545, 1.442695
  %v2547 = vpow.pop %v2546
  %v2548 = vsel %vm1688, %v2547, 0.0
  %2549 = vadd.xlane.f32.xlu0 %v2548
  %v2550 = vpop.xlane.xlu0 %2549
  %v2551 = vrcp.pop %v2550
  %v2552 = vmul.f32 %v2550, %v2551
  %v2553 = vsub.f32 1.0, %v2552
  %v2554 = vmul.f32 %v2551, %v2553
  %v2555 = vadd.f32 %v2551, %v2554
  %vm2556 = vweird.f32 %v2550
  %vm2557 = vweird.f32 %v2551
  %vm2558 = vmor %vm2556, %vm2557
  %v2559 = vsel %vm2558, %v2551, %v2555
  %v2560 = vand.u32 2147483647, %v2550
  %vm2561 = vcmp.eq.f32.partialorder %v2560, 8.507059e+37
  %v2562 = vand.u32 %v2550, 2147483648
  %v2563 = vor.u32 1.1754944e-38, %v2562
  %v2564 = vsel %vm2561, %v2563, %v2559
  %v2565 = vmul.f32 %v2547, %v2564
  %2567 = vrot.lane.b32.xlu0 %v2565, 10
  %v2568 = vpop.permute.xlu0 %2567
  %v2570 = vsel %vm1688, %v2540, %v2568
  %vm2571 = vcmask 162816
  %2572 = vst.msk [vmem:[%s11] sm:$0xff] %vm2571, %v2570
  // Predicated region
  $region46: #{garment_forward.1} parent=0 // pred_check
    _
  $region47: #{garment_forward.1} parent=0 // pred_check_branch
    %2574 = sbr.rel (0) target = $region49
  $region48: #{garment_forward.1} parent=0 // pred_region
    _
  $region49: #{garment_forward.1} parent=0 // pred_fallthru
    _
  // Predicated region
  $region50: #{garment_forward.1} parent=0 // pred_check
    _
  $region51: #{garment_forward.1} parent=0 // pred_check_branch
    %2576 = sbr.rel (0) target = $region53
  $region52: #{garment_forward.1} parent=0 // pred_region
    _
  $region53: #{garment_forward.1} parent=0 // pred_fallthru
    _

</llo_original>
